<compile_context>
chip_gen: v5e
topology: v5e:2x2
jax: 0.10.0
libtpu: 0.0.40
codegen_flags: <defaults>
</compile_context>

<pallas_src>
import functools

import jax
import jax.numpy as jnp
from jax.experimental import pallas as pl
from jax.experimental.pallas import tpu as pltpu

_PAD = 3                       # halo width = max ASPP dilation
_VMEM_LIMIT = 32 * 1024 * 1024


# ------------------------------------------------------------------ utilities
def _round_up(x, m):
    return (x + m - 1) // m * m


def _choose_tm(mp, k, cout, *, in_bytes=2, out_bytes=2, budget=12 << 20):
    """Largest row tile (divisor of mp) whose double-buffered blocks fit budget.

    No forced >=2-block split for small M (pure overhead on single-TC v5e/v6e);
    only split when each half still has >=128 rows, which keeps both v7x
    TensorCores busy at production M without shrinking tiny matmuls.
    """
    best = 8
    for tm in (8, 16, 32, 64, 128, 256, 512, 1024):
        if tm > mp or mp % tm:
            continue
        need = 2 * tm * (k * in_bytes + cout * out_bytes) + k * cout * in_bytes
        if need <= budget:
            best = tm
    if best == mp and mp >= 256 and (mp // 2) % 8 == 0:
        best = mp // 2
    return best


# ------------------------------------------------------------ Pallas kernels
def _matmul_scale_bias_kernel(x_ref, w_ref, s_ref, b_ref, o_ref, *, relu):
    """Full-K matmul with fused folded-BN scale/bias + ReLU (stem conv)."""
    y = jnp.dot(x_ref[...], w_ref[...], preferred_element_type=jnp.float32)
    y = y * s_ref[...] + b_ref[...]
    if relu:
        y = jnp.maximum(y, 0.0)
    o_ref[...] = y.astype(o_ref.dtype)


def _fused_head_kernel(ps_ref,
                       w2_ref, s2_ref, b2_ref,
                       w0_ref, s0_ref, b0_ref,
                       wd2_ref, sd2_ref, bd2_ref,
                       wd3_ref, sd3_ref, bd3_ref,
                       wpl_ref, spl_ref, bpl_ref,
                       wjm_ref, wjp_ref, sj_ref, bj_ref,
                       wc_ref, bc_ref,
                       o_ref, halo_ref, *, ho, wo, pad):
    """stem2 conv + full ASPP head + project + classifier for one batch element.

    The stem2 feature map is scattered into a zero halo buffer stored as
    flattened padded rows ((ho+2p)*(wo+2p), C); every branch then works on
    mrow = (ho-1)*(wo+2p) + wo rows where row m corresponds to output (i, j)
    at m = i*(wo+2p) + j and the in-between halo rows are exactly zero junk
    (discarded by the wrapper).  All intermediates stay in VMEM/vregs.
    """
    wp = wo + 2 * pad
    mrow = (ho - 1) * wp + wo
    base = pad * wp + pad

    # ---- stem2 conv (patches pre-im2col'd in the wrapper) -------------------
    f = jnp.dot(ps_ref[0], w2_ref[...], preferred_element_type=jnp.float32)
    f = jnp.maximum(f * s2_ref[...] + b2_ref[...], 0.0)          # [ho*wo, C] f32

    # ---- scatter into the zero halo buffer ----------------------------------
    halo_ref[...] = jnp.zeros(halo_ref.shape, halo_ref.dtype)
    for i in range(ho):
        halo_ref[base + i * wp: base + i * wp + wo, :] = f[i * wo:(i + 1) * wo, :]
    fp = halo_ref[...]                                           # [(ho+2p)*wp, C]

    x0 = fp[base: base + mrow, :]                                # halo rows == 0

    def branch(x_bf16, w_ref_, s_ref_, b_ref_):
        y = jnp.dot(x_bf16, w_ref_[...], preferred_element_type=jnp.float32)
        return jnp.maximum(y * s_ref_[...] + b_ref_[...], 0.0)

    # 1x1 branch
    a0 = branch(x0.astype(jnp.bfloat16), w0_ref, s0_ref, b0_ref)      # [mrow, A]

    # dilated 3x3 branches: in-kernel im2col = 9 static halo slices -> one K=9C dot
    def dilated(d, w_ref_, s_ref_, b_ref_):
        taps = [fp[base + dr * d * wp + dc * d:
                   base + dr * d * wp + dc * d + mrow, :]
                for dr in (-1, 0, 1) for dc in (-1, 0, 1)]
        cat = jnp.concatenate(taps, axis=-1).astype(jnp.bfloat16)     # [mrow, 9C]
        return branch(cat, w_ref_, s_ref_, b_ref_)

    a1 = dilated(2, wd2_ref, sd2_ref, bd2_ref)
    a2 = dilated(3, wd3_ref, sd3_ref, bd3_ref)

    # image-pool branch: matmul BEFORE broadcast.  Halo rows of x0 are exactly
    # zero, so sum over all rows / (ho*wo) is the exact global spatial mean.
    pooled = jnp.sum(x0, axis=0, keepdims=True) * (1.0 / (ho * wo))   # [1, C]
    apool = branch(pooled.astype(jnp.bfloat16), wpl_ref, spl_ref, bpl_ref)  # [1, A]

    # project 1x1: single K=3A dot over concat(b0,b1,b2) + row-broadcast pool term
    # (broadcast(apool) @ wj_pool == broadcast(apool @ wj_pool), exact).
    cat3 = jnp.concatenate([a0, a1, a2], axis=-1).astype(jnp.bfloat16)  # [mrow, 3A]
    acc = jnp.dot(cat3, wjm_ref[...], preferred_element_type=jnp.float32)
    acc = acc + jnp.dot(apool.astype(jnp.bfloat16), wjp_ref[...],
                        preferred_element_type=jnp.float32)
    proj = jnp.maximum(acc * sj_ref[...] + bj_ref[...], 0.0)            # [mrow, A]

    # classifier 1x1 (bias only; no identity BN epilogue)
    logits = jnp.dot(proj.astype(jnp.bfloat16), wc_ref[...],
                     preferred_element_type=jnp.float32) + bc_ref[...]
    o_ref[0] = logits.astype(o_ref.dtype)


# --------------------------------------------------------------- Pallas calls
def matmul_scale_bias(x2d, w2d, scale2d, bias2d, *, relu=True,
                      out_dtype=jnp.bfloat16):
    """x2d: [M, K] bf16, w2d: [K, Cout] bf16, scale/bias: [1, Cout] f32."""
    M, K = x2d.shape
    Cout = w2d.shape[1]
    Mp = _round_up(M, 8)
    if Mp != M:                               # never hit for even spatial sizes
        x2d = jnp.pad(x2d, ((0, Mp - M), (0, 0)))
    TM = _choose_tm(Mp, K, Cout)
    grid = (Mp // TM,)

    flops = 2 * Mp * K * Cout
    bytes_accessed = (Mp * K * 2 + K * Cout * 2 + 2 * Cout * 4
                      + Mp * Cout * jnp.dtype(out_dtype).itemsize)

    out = pl.pallas_call(
        functools.partial(_matmul_scale_bias_kernel, relu=relu),
        out_shape=jax.ShapeDtypeStruct((Mp, Cout), out_dtype),
        grid=grid,
        in_specs=[
            pl.BlockSpec((TM, K), lambda i: (i, 0)),       # full-K block
            pl.BlockSpec((K, Cout), lambda i: (0, 0)),     # full weight
            pl.BlockSpec((1, Cout), lambda i: (0, 0)),
            pl.BlockSpec((1, Cout), lambda i: (0, 0)),
        ],
        out_specs=pl.BlockSpec((TM, Cout), lambda i: (i, 0)),
        compiler_params=pltpu.CompilerParams(
            dimension_semantics=("parallel",),
            vmem_limit_bytes=_VMEM_LIMIT),
        cost_estimate=pl.CostEstimate(flops=flops, transcendentals=0,
                                      bytes_accessed=bytes_accessed),
    )(x2d, w2d, scale2d, bias2d)
    return out[:M] if Mp != M else out


def fused_stem2_aspp_head(p2s, params, *, ho, wo):
    """p2s: stem2 im2col patches [N, ho*wo, 9*C1] bf16 -> logits [N, mrow, NC] bf16."""
    N, HW2, K2 = p2s.shape
    w2, s2, b2 = params["stem2"]
    w0, s0, b0 = params["aspp0"]
    wd2, sd2, bd2 = params["aspp1"]
    wd3, sd3, bd3 = params["aspp2"]
    wpl, spl, bpl = params["aspp_pool"]
    wjm, wjp, sj, bj = params["project"]
    wc, bc = params["classifier"]
    C = w2.shape[1]
    A = w0.shape[1]
    NC = wc.shape[1]
    wpr = wo + 2 * _PAD
    mrow = (ho - 1) * wpr + wo

    weights = (w2, s2, b2, w0, s0, b0, wd2, sd2, bd2, wd3, sd3, bd3,
               wpl, spl, bpl, wjm, wjp, sj, bj, wc, bc)
    flops = 2 * N * (HW2 * K2 * C
                     + mrow * (C * A + 2 * 9 * C * A + 3 * A * A + A * NC)
                     + C * A + A * A)
    bytes_accessed = int(N * (HW2 * K2 * 2 + mrow * NC * 2)
                         + sum(int(a.size) * a.dtype.itemsize for a in weights))

    def wspec(arr):
        nd = arr.ndim
        return pl.BlockSpec(arr.shape, lambda n, _nd=nd: (0,) * _nd)

    out = pl.pallas_call(
        functools.partial(_fused_head_kernel, ho=ho, wo=wo, pad=_PAD),
        out_shape=jax.ShapeDtypeStruct((N, mrow, NC), jnp.bfloat16),
        grid=(N,),
        in_specs=[pl.BlockSpec((1, HW2, K2), lambda n: (n, 0, 0))]
                 + [wspec(a) for a in weights],
        out_specs=pl.BlockSpec((1, mrow, NC), lambda n: (n, 0, 0)),
        scratch_shapes=[pltpu.VMEM(((ho + 2 * _PAD) * wpr, C), jnp.float32)],
        compiler_params=pltpu.CompilerParams(
            dimension_semantics=("parallel",),
            vmem_limit_bytes=_VMEM_LIMIT),
        cost_estimate=pl.CostEstimate(flops=flops, transcendentals=0,
                                      bytes_accessed=bytes_accessed),
    )(p2s, *weights)
    return out


# ---------------------------------------------------- conv = im2col + Pallas
def _im2col(x, kh, kw, stride, padding, dilation):
    """x: [N, H, W, Cin] -> ([N, Ho, Wo, kh*kw*Cin], Ho, Wo). (wrapper glue)"""
    if padding:
        x = jnp.pad(x, ((0, 0), (padding, padding), (padding, padding), (0, 0)))
    Hp, Wp = x.shape[1], x.shape[2]
    Ho = (Hp - dilation * (kh - 1) - 1) // stride + 1
    Wo = (Wp - dilation * (kw - 1) - 1) // stride + 1
    if kh == 1 and kw == 1 and stride == 1:
        return x, Ho, Wo
    cols = []
    for r in range(kh):
        for c in range(kw):
            cols.append(
                x[:,
                  r * dilation: r * dilation + (Ho - 1) * stride + 1: stride,
                  c * dilation: c * dilation + (Wo - 1) * stride + 1: stride,
                  :])
    return jnp.concatenate(cols, axis=-1), Ho, Wo


# ------------------------------------------------------------------ the model
def _make_conv_bn(key, kh, kw, cin, cout):
    """Weights pre-reshaped for im2col matmul, pre-cast to bf16; folded BN."""
    kw_, ks_, kb_ = jax.random.split(key, 3)
    w = jax.random.normal(kw_, (kh, kw, cin, cout), jnp.float32) / jnp.sqrt(
        float(kh * kw * cin))
    scale = 1.0 + 0.1 * jax.random.normal(ks_, (cout,), jnp.float32)
    bias = 0.1 * jax.random.normal(kb_, (cout,), jnp.float32)
    return (w.reshape(kh * kw * cin, cout).astype(jnp.bfloat16),
            scale.reshape(1, cout), bias.reshape(1, cout))


def init_params(key, in_ch=4, num_classes=8, aspp_ch=16):
    keys = jax.random.split(key, 9)
    p = {}
    p["stem1"] = _make_conv_bn(keys[0], 3, 3, in_ch, 16)       # stride 2
    p["stem2"] = _make_conv_bn(keys[1], 3, 3, 16, 32)          # stride 2 (OS=4)
    p["aspp0"] = _make_conv_bn(keys[2], 1, 1, 32, aspp_ch)     # 1x1
    p["aspp1"] = _make_conv_bn(keys[3], 3, 3, 32, aspp_ch)     # dilation 2
    p["aspp2"] = _make_conv_bn(keys[4], 3, 3, 32, aspp_ch)     # dilation 3
    p["aspp_pool"] = _make_conv_bn(keys[5], 1, 1, 32, aspp_ch)
    wj, sj, cj = _make_conv_bn(keys[6], 1, 1, 4 * aspp_ch, aspp_ch)
    # project weight pre-split: K rows for the 3 spatial branches / pooled branch
    p["project"] = (wj[:3 * aspp_ch], wj[3 * aspp_ch:], sj, cj)
    wc = (jax.random.normal(keys[7], (aspp_ch, num_classes), jnp.float32)
          / jnp.sqrt(float(aspp_ch))).astype(jnp.bfloat16)
    bc = 0.01 * jax.random.normal(keys[8], (1, num_classes), jnp.float32)
    p["classifier"] = (wc, bc)
    return p


def deeplabv3_wrapper_forward(params, x_nchw):
    """Equivalent of DeepLabV3Wrapper.forward: returns model(input)['out'] (NCHW)."""
    x = jnp.transpose(x_nchw, (0, 2, 3, 1)).astype(jnp.bfloat16)   # NCHW -> NHWC
    N, H, W, _ = x.shape

    # stem1 (stride 2): im2col in the wrapper, matmul + folded-BN + ReLU in Pallas
    p1, H1, W1 = _im2col(x, 3, 3, 2, 1, 1)
    f1 = matmul_scale_bias(p1.reshape(N * H1 * W1, -1), *params["stem1"])
    f1 = f1.reshape(N, H1, W1, -1)

    # stem2 patches (wrapper glue); stem2 conv + full ASPP head + project +
    # classifier all run inside ONE fused Pallas kernel.
    # TODO(synk): fuse stem1 too via strided halo loads for the stride-2 taps.
    p2, H2, W2 = _im2col(f1, 3, 3, 2, 1, 1)
    p2 = p2.reshape(N, H2 * W2, -1)
    lp = fused_stem2_aspp_head(p2, params, ho=H2, wo=W2)   # [N, mrow, NC] bf16

    # un-flatten the halo row layout: valid rows are i*(W2+2*_PAD) + j, j < W2
    wpr = W2 + 2 * _PAD
    mrow = (H2 - 1) * wpr + W2
    lp = jnp.pad(lp, ((0, 0), (0, H2 * wpr - mrow), (0, 0)))
    logits = lp.reshape(N, H2, wpr, -1)[:, :, :W2, :].astype(jnp.float32)

    # TODO(synk): final bilinear upsample (F.interpolate, align_corners=False)
    # kept in plain JAX (gather-heavy interpolation, not the matmul hot path).
    out = jax.image.resize(logits, (N, H, W, logits.shape[-1]), method="bilinear")

    # model(...)['out'] is returned in NCHW, like PyTorch
    return jnp.transpose(out, (0, 3, 1, 2))


# ------------------------------------------------------------------- run once
if __name__ == "__main__":
    key = jax.random.PRNGKey(0)
    k_param, k_input = jax.random.split(key)

    batch, in_ch, spatial, num_classes = 2, 4, 16, 8
    params = init_params(k_param, in_ch=in_ch, num_classes=num_classes)
    x = jax.random.normal(k_input, (batch, in_ch, spatial, spatial), jnp.float32)

    fwd = jax.jit(deeplabv3_wrapper_forward)
    out = jax.block_until_ready(fwd(params, x))

    assert out.shape == (batch, num_classes, spatial, spatial), out.shape
    assert out.dtype == jnp.float32
    print("KERNEL_OK")
</pallas_src>

<mosaic_0001>
module attributes {stable_mosaic.version = 11 : i64} {
  func.func @_matmul_scale_bias_kernel(%arg0: i32, %arg1: memref<128x36xbf16, #tpu.memory_space<vmem>>, %arg2: memref<36x16xbf16, #tpu.memory_space<vmem>>, %arg3: memref<1x16xf32, #tpu.memory_space<vmem>>, %arg4: memref<1x16xf32, #tpu.memory_space<vmem>>, %arg5: memref<128x16xbf16, #tpu.memory_space<vmem>>) attributes {dimension_semantics = [#tpu.dimension_semantics<parallel>], iteration_bounds = array<i64: 1>, scalar_prefetch = 0 : i64, scratch_operands = 0 : i64, tpu.core_type = #tpu.core_type<tc>, window_params = [{transform_indices = @transform_0, window_bounds = array<i64: 128, 36>}, {pipeline_mode = #tpu.pipeline_mode<synchronous>, transform_indices = @transform_1, window_bounds = array<i64: 36, 16>}, {pipeline_mode = #tpu.pipeline_mode<synchronous>, transform_indices = @transform_2, window_bounds = array<i64: 1, 16>}, {pipeline_mode = #tpu.pipeline_mode<synchronous>, transform_indices = @transform_3, window_bounds = array<i64: 1, 16>}, {transform_indices = @transform_4, window_bounds = array<i64: 128, 16>}]} {
    %c0 = arith.constant 0 : index
    %c0_0 = arith.constant 0 : index
    %0 = vector.load %arg1[%c0, %c0_0] : memref<128x36xbf16, #tpu.memory_space<vmem>>, vector<128x36xbf16>
    %c0_1 = arith.constant 0 : index
    %c0_2 = arith.constant 0 : index
    %1 = vector.load %arg2[%c0_1, %c0_2] : memref<36x16xbf16, #tpu.memory_space<vmem>>, vector<36x16xbf16>
    %cst = arith.constant dense<0.000000e+00> : vector<128x16xf32>
    %2 = tpu.matmul %0, %1, %cst {dimension_numbers = #tpu.dot_dimension_numbers<[1], [0], [0], [1], [0, 0, 1, 1], [], []>} : vector<128x36xbf16>, vector<36x16xbf16>, vector<128x16xf32> -> vector<128x16xf32>
    %c0_3 = arith.constant 0 : index
    %c0_4 = arith.constant 0 : index
    %3 = vector.load %arg3[%c0_3, %c0_4] : memref<1x16xf32, #tpu.memory_space<vmem>>, vector<1x16xf32>
    %4 = vector.broadcast %3 : vector<1x16xf32> to vector<128x16xf32>
    %5 = arith.mulf %2, %4 : vector<128x16xf32>
    %c0_5 = arith.constant 0 : index
    %c0_6 = arith.constant 0 : index
    %6 = vector.load %arg4[%c0_5, %c0_6] : memref<1x16xf32, #tpu.memory_space<vmem>>, vector<1x16xf32>
    %7 = vector.broadcast %6 : vector<1x16xf32> to vector<128x16xf32>
    %8 = arith.addf %5, %7 : vector<128x16xf32>
    %cst_7 = arith.constant 0.000000e+00 : f32
    %9 = vector.broadcast %cst_7 : f32 to vector<128x16xf32>
    %10 = arith.maximumf %8, %9 : vector<128x16xf32>
    %11 = arith.truncf %10 : vector<128x16xf32> to vector<128x16xbf16>
    %c0_8 = arith.constant 0 : index
    %c0_9 = arith.constant 0 : index
    %12 = vector.load %arg5[%c0_8, %c0_9] : memref<128x16xbf16, #tpu.memory_space<vmem>>, vector<128x16xbf16>
    tpu.vector_store %arg5[%c0_8, %c0_9], %11 {strides = array<i32>} : memref<128x16xbf16, #tpu.memory_space<vmem>>, vector<128x16xbf16>,
    return
  }
  func.func @transform_0(%arg0: i32) -> (i32, i32) {
    %c0_i32 = arith.constant 0 : i32
    %c0_i32_0 = arith.constant 0 : i32
    return %arg0, %c0_i32 : i32, i32
  }
  func.func @transform_1(%arg0: i32) -> (i32, i32) {
    %c0_i32 = arith.constant 0 : i32
    %c0_i32_0 = arith.constant 0 : i32
    %c0_i32_1 = arith.constant 0 : i32
    return %c0_i32, %c0_i32_0 : i32, i32
  }
  func.func @transform_2(%arg0: i32) -> (i32, i32) {
    %c0_i32 = arith.constant 0 : i32
    %c0_i32_0 = arith.constant 0 : i32
    %c0_i32_1 = arith.constant 0 : i32
    return %c0_i32, %c0_i32_0 : i32, i32
  }
  func.func @transform_3(%arg0: i32) -> (i32, i32) {
    %c0_i32 = arith.constant 0 : i32
    %c0_i32_0 = arith.constant 0 : i32
    %c0_i32_1 = arith.constant 0 : i32
    return %c0_i32, %c0_i32_0 : i32, i32
  }
  func.func @transform_4(%arg0: i32) -> (i32, i32) {
    %c0_i32 = arith.constant 0 : i32
    %c0_i32_0 = arith.constant 0 : i32
    return %arg0, %c0_i32 : i32, i32
  }
}

module attributes {stable_mosaic.version = 11 : i64} {
  func.func @_fused_head_kernel(%arg0: i32, %arg1: memref<1x16x144xbf16, #tpu.memory_space<vmem>>, %arg2: memref<144x32xbf16, #tpu.memory_space<vmem>>, %arg3: memref<1x32xf32, #tpu.memory_space<vmem>>, %arg4: memref<1x32xf32, #tpu.memory_space<vmem>>, %arg5: memref<32x16xbf16, #tpu.memory_space<vmem>>, %arg6: memref<1x16xf32, #tpu.memory_space<vmem>>, %arg7: memref<1x16xf32, #tpu.memory_space<vmem>>, %arg8: memref<288x16xbf16, #tpu.memory_space<vmem>>, %arg9: memref<1x16xf32, #tpu.memory_space<vmem>>, %arg10: memref<1x16xf32, #tpu.memory_space<vmem>>, %arg11: memref<288x16xbf16, #tpu.memory_space<vmem>>, %arg12: memref<1x16xf32, #tpu.memory_space<vmem>>, %arg13: memref<1x16xf32, #tpu.memory_space<vmem>>, %arg14: memref<32x16xbf16, #tpu.memory_space<vmem>>, %arg15: memref<1x16xf32, #tpu.memory_space<vmem>>, %arg16: memref<1x16xf32, #tpu.memory_space<vmem>>, %arg17: memref<48x16xbf16, #tpu.memory_space<vmem>>, %arg18: memref<16x16xbf16, #tpu.memory_space<vmem>>, %arg19: memref<1x16xf32, #tpu.memory_space<vmem>>, %arg20: memref<1x16xf32, #tpu.memory_space<vmem>>, %arg21: memref<16x8xbf16, #tpu.memory_space<vmem>>, %arg22: memref<1x8xf32, #tpu.memory_space<vmem>>, %arg23: memref<1x34x8xbf16, #tpu.memory_space<vmem>>, %arg24: memref<100x32xf32, #tpu.memory_space<vmem>>) attributes {dimension_semantics = [#tpu.dimension_semantics<parallel>], iteration_bounds = array<i64: 2>, scalar_prefetch = 0 : i64, scratch_operands = 1 : i64, tpu.core_type = #tpu.core_type<tc>, window_params = [{transform_indices = @transform_0, window_bounds = array<i64: 1, 16, 144>}, {pipeline_mode = #tpu.pipeline_mode<synchronous>, transform_indices = @transform_1, window_bounds = array<i64: 144, 32>}, {pipeline_mode = #tpu.pipeline_mode<synchronous>, transform_indices = @transform_2, window_bounds = array<i64: 1, 32>}, {pipeline_mode = #tpu.pipeline_mode<synchronous>, transform_indices = @transform_3, window_bounds = array<i64: 1, 32>}, {pipeline_mode = #tpu.pipeline_mode<synchronous>, transform_indices = @transform_4, window_bounds = array<i64: 32, 16>}, {pipeline_mode = #tpu.pipeline_mode<synchronous>, transform_indices = @transform_5, window_bounds = array<i64: 1, 16>}, {pipeline_mode = #tpu.pipeline_mode<synchronous>, transform_indices = @transform_6, window_bounds = array<i64: 1, 16>}, {pipeline_mode = #tpu.pipeline_mode<synchronous>, transform_indices = @transform_7, window_bounds = array<i64: 288, 16>}, {pipeline_mode = #tpu.pipeline_mode<synchronous>, transform_indices = @transform_8, window_bounds = array<i64: 1, 16>}, {pipeline_mode = #tpu.pipeline_mode<synchronous>, transform_indices = @transform_9, window_bounds = array<i64: 1, 16>}, {pipeline_mode = #tpu.pipeline_mode<synchronous>, transform_indices = @transform_10, window_bounds = array<i64: 288, 16>}, {pipeline_mode = #tpu.pipeline_mode<synchronous>, transform_indices = @transform_11, window_bounds = array<i64: 1, 16>}, {pipeline_mode = #tpu.pipeline_mode<synchronous>, transform_indices = @transform_12, window_bounds = array<i64: 1, 16>}, {pipeline_mode = #tpu.pipeline_mode<synchronous>, transform_indices = @transform_13, window_bounds = array<i64: 32, 16>}, {pipeline_mode = #tpu.pipeline_mode<synchronous>, transform_indices = @transform_14, window_bounds = array<i64: 1, 16>}, {pipeline_mode = #tpu.pipeline_mode<synchronous>, transform_indices = @transform_15, window_bounds = array<i64: 1, 16>}, {pipeline_mode = #tpu.pipeline_mode<synchronous>, transform_indices = @transform_16, window_bounds = array<i64: 48, 16>}, {pipeline_mode = #tpu.pipeline_mode<synchronous>, transform_indices = @transform_17, window_bounds = array<i64: 16, 16>}, {pipeline_mode = #tpu.pipeline_mode<synchronous>, transform_indices = @transform_18, window_bounds = array<i64: 1, 16>}, {pipeline_mode = #tpu.pipeline_mode<synchronous>, transform_indices = @transform_19, window_bounds = array<i64: 1, 16>}, {pipeline_mode = #tpu.pipeline_mode<synchronous>, transform_indices = @transform_20, window_bounds = array<i64: 16, 8>}, {pipeline_mode = #tpu.pipeline_mode<synchronous>, transform_indices = @transform_21, window_bounds = array<i64: 1, 8>}, {transform_indices = @transform_22, window_bounds = array<i64: 1, 34, 8>}]} {
    %c0 = arith.constant 0 : index
    %c0_0 = arith.constant 0 : index
    %c0_1 = arith.constant 0 : index
    %0 = vector.load %arg1[%c0, %c0_0, %c0_1] : memref<1x16x144xbf16, #tpu.memory_space<vmem>>, vector<1x16x144xbf16>
    %1 = vector.shape_cast %0 : vector<1x16x144xbf16> to vector<16x144xbf16>
    %c0_2 = arith.constant 0 : index
    %c0_3 = arith.constant 0 : index
    %2 = vector.load %arg2[%c0_2, %c0_3] : memref<144x32xbf16, #tpu.memory_space<vmem>>, vector<144x32xbf16>
    %cst = arith.constant dense<0.000000e+00> : vector<16x32xf32>
    %3 = tpu.matmul %1, %2, %cst {dimension_numbers = #tpu.dot_dimension_numbers<[1], [0], [0], [1], [0, 0, 1, 1], [], []>} : vector<16x144xbf16>, vector<144x32xbf16>, vector<16x32xf32> -> vector<16x32xf32>
    %c0_4 = arith.constant 0 : index
    %c0_5 = arith.constant 0 : index
    %4 = vector.load %arg3[%c0_4, %c0_5] : memref<1x32xf32, #tpu.memory_space<vmem>>, vector<1x32xf32>
    %5 = vector.broadcast %4 : vector<1x32xf32> to vector<16x32xf32>
    %6 = arith.mulf %3, %5 : vector<16x32xf32>
    %c0_6 = arith.constant 0 : index
    %c0_7 = arith.constant 0 : index
    %7 = vector.load %arg4[%c0_6, %c0_7] : memref<1x32xf32, #tpu.memory_space<vmem>>, vector<1x32xf32>
    %8 = vector.broadcast %7 : vector<1x32xf32> to vector<16x32xf32>
    %9 = arith.addf %6, %8 : vector<16x32xf32>
    %cst_8 = arith.constant 0.000000e+00 : f32
    %10 = vector.broadcast %cst_8 : f32 to vector<16x32xf32>
    %11 = arith.maximumf %9, %10 : vector<16x32xf32>
    %cst_9 = arith.constant 0.000000e+00 : f32
    %12 = vector.broadcast %cst_9 : f32 to vector<100x32xf32>
    %c0_10 = arith.constant 0 : index
    %c0_11 = arith.constant 0 : index
    %13 = vector.load %arg24[%c0_10, %c0_11] : memref<100x32xf32, #tpu.memory_space<vmem>>, vector<100x32xf32>
    tpu.vector_store %arg24[%c0_10, %c0_11], %12 {strides = array<i32>} : memref<100x32xf32, #tpu.memory_space<vmem>>, vector<100x32xf32>,
    %14 = vector.extract_strided_slice %11 {offsets = [0, 0], sizes = [4, 32], strides = [1, 1]} : vector<16x32xf32> to vector<4x32xf32>
    %c33 = arith.constant 33 : index
    %c0_12 = arith.constant 0 : index
    %15 = vector.load %arg24[%c33, %c0_12] : memref<100x32xf32, #tpu.memory_space<vmem>>, vector<4x32xf32>
    tpu.vector_store %arg24[%c33, %c0_12], %14 {strides = array<i32>} : memref<100x32xf32, #tpu.memory_space<vmem>>, vector<4x32xf32>,
    %16 = vector.extract_strided_slice %11 {offsets = [4, 0], sizes = [4, 32], strides = [1, 1]} : vector<16x32xf32> to vector<4x32xf32>
    %c43 = arith.constant 43 : index
    %c0_13 = arith.constant 0 : index
    %17 = vector.load %arg24[%c43, %c0_13] : memref<100x32xf32, #tpu.memory_space<vmem>>, vector<4x32xf32>
    tpu.vector_store %arg24[%c43, %c0_13], %16 {strides = array<i32>} : memref<100x32xf32, #tpu.memory_space<vmem>>, vector<4x32xf32>,
    %18 = vector.extract_strided_slice %11 {offsets = [8, 0], sizes = [4, 32], strides = [1, 1]} : vector<16x32xf32> to vector<4x32xf32>
    %c53 = arith.constant 53 : index
    %c0_14 = arith.constant 0 : index
    %19 = vector.load %arg24[%c53, %c0_14] : memref<100x32xf32, #tpu.memory_space<vmem>>, vector<4x32xf32>
    tpu.vector_store %arg24[%c53, %c0_14], %18 {strides = array<i32>} : memref<100x32xf32, #tpu.memory_space<vmem>>, vector<4x32xf32>,
    %20 = vector.extract_strided_slice %11 {offsets = [12, 0], sizes = [4, 32], strides = [1, 1]} : vector<16x32xf32> to vector<4x32xf32>
    %c63 = arith.constant 63 : index
    %c0_15 = arith.constant 0 : index
    %21 = vector.load %arg24[%c63, %c0_15] : memref<100x32xf32, #tpu.memory_space<vmem>>, vector<4x32xf32>
    tpu.vector_store %arg24[%c63, %c0_15], %20 {strides = array<i32>} : memref<100x32xf32, #tpu.memory_space<vmem>>, vector<4x32xf32>,
    %c0_16 = arith.constant 0 : index
    %c0_17 = arith.constant 0 : index
    %22 = vector.load %arg24[%c0_16, %c0_17] : memref<100x32xf32, #tpu.memory_space<vmem>>, vector<100x32xf32>
    %23 = vector.extract_strided_slice %22 {offsets = [33, 0], sizes = [34, 32], strides = [1, 1]} : vector<100x32xf32> to vector<34x32xf32>
    %24 = arith.truncf %23 : vector<34x32xf32> to vector<34x32xbf16>
    %c0_18 = arith.constant 0 : index
    %c0_19 = arith.constant 0 : index
    %25 = vector.load %arg5[%c0_18, %c0_19] : memref<32x16xbf16, #tpu.memory_space<vmem>>, vector<32x16xbf16>
    %cst_20 = arith.constant dense<0.000000e+00> : vector<34x16xf32>
    %26 = tpu.matmul %24, %25, %cst_20 {dimension_numbers = #tpu.dot_dimension_numbers<[1], [0], [0], [1], [0, 0, 1, 1], [], []>} : vector<34x32xbf16>, vector<32x16xbf16>, vector<34x16xf32> -> vector<34x16xf32>
    %c0_21 = arith.constant 0 : index
    %c0_22 = arith.constant 0 : index
    %27 = vector.load %arg6[%c0_21, %c0_22] : memref<1x16xf32, #tpu.memory_space<vmem>>, vector<1x16xf32>
    %28 = vector.broadcast %27 : vector<1x16xf32> to vector<34x16xf32>
    %29 = arith.mulf %26, %28 : vector<34x16xf32>
    %c0_23 = arith.constant 0 : index
    %c0_24 = arith.constant 0 : index
    %30 = vector.load %arg7[%c0_23, %c0_24] : memref<1x16xf32, #tpu.memory_space<vmem>>, vector<1x16xf32>
    %31 = vector.broadcast %30 : vector<1x16xf32> to vector<34x16xf32>
    %32 = arith.addf %29, %31 : vector<34x16xf32>
    %cst_25 = arith.constant 0.000000e+00 : f32
    %33 = vector.broadcast %cst_25 : f32 to vector<34x16xf32>
    %34 = arith.maximumf %32, %33 : vector<34x16xf32>
    %35 = vector.extract_strided_slice %22 {offsets = [11, 0], sizes = [34, 32], strides = [1, 1]} : vector<100x32xf32> to vector<34x32xf32>
    %36 = vector.extract_strided_slice %22 {offsets = [13, 0], sizes = [34, 32], strides = [1, 1]} : vector<100x32xf32> to vector<34x32xf32>
    %37 = vector.extract_strided_slice %22 {offsets = [15, 0], sizes = [34, 32], strides = [1, 1]} : vector<100x32xf32> to vector<34x32xf32>
    %38 = vector.extract_strided_slice %22 {offsets = [31, 0], sizes = [34, 32], strides = [1, 1]} : vector<100x32xf32> to vector<34x32xf32>
    %39 = vector.extract_strided_slice %22 {offsets = [33, 0], sizes = [34, 32], strides = [1, 1]} : vector<100x32xf32> to vector<34x32xf32>
    %40 = vector.extract_strided_slice %22 {offsets = [35, 0], sizes = [34, 32], strides = [1, 1]} : vector<100x32xf32> to vector<34x32xf32>
    %41 = vector.extract_strided_slice %22 {offsets = [51, 0], sizes = [34, 32], strides = [1, 1]} : vector<100x32xf32> to vector<34x32xf32>
    %42 = vector.extract_strided_slice %22 {offsets = [53, 0], sizes = [34, 32], strides = [1, 1]} : vector<100x32xf32> to vector<34x32xf32>
    %43 = vector.extract_strided_slice %22 {offsets = [55, 0], sizes = [34, 32], strides = [1, 1]} : vector<100x32xf32> to vector<34x32xf32>
    %44 = tpu.concatenate %35, %36, %37, %38, %39, %40, %41, %42, %43 in 1 : vector<34x32xf32>, vector<34x32xf32>, vector<34x32xf32>, vector<34x32xf32>, vector<34x32xf32>, vector<34x32xf32>, vector<34x32xf32>, vector<34x32xf32>, vector<34x32xf32> -> vector<34x288xf32>
    %45 = arith.truncf %44 : vector<34x288xf32> to vector<34x288xbf16>
    %c0_26 = arith.constant 0 : index
    %c0_27 = arith.constant 0 : index
    %46 = vector.load %arg8[%c0_26, %c0_27] : memref<288x16xbf16, #tpu.memory_space<vmem>>, vector<288x16xbf16>
    %cst_28 = arith.constant dense<0.000000e+00> : vector<34x16xf32>
    %47 = tpu.matmul %45, %46, %cst_28 {dimension_numbers = #tpu.dot_dimension_numbers<[1], [0], [0], [1], [0, 0, 1, 1], [], []>} : vector<34x288xbf16>, vector<288x16xbf16>, vector<34x16xf32> -> vector<34x16xf32>
    %c0_29 = arith.constant 0 : index
    %c0_30 = arith.constant 0 : index
    %48 = vector.load %arg9[%c0_29, %c0_30] : memref<1x16xf32, #tpu.memory_space<vmem>>, vector<1x16xf32>
    %49 = vector.broadcast %48 : vector<1x16xf32> to vector<34x16xf32>
    %50 = arith.mulf %47, %49 : vector<34x16xf32>
    %c0_31 = arith.constant 0 : index
    %c0_32 = arith.constant 0 : index
    %51 = vector.load %arg10[%c0_31, %c0_32] : memref<1x16xf32, #tpu.memory_space<vmem>>, vector<1x16xf32>
    %52 = vector.broadcast %51 : vector<1x16xf32> to vector<34x16xf32>
    %53 = arith.addf %50, %52 : vector<34x16xf32>
    %cst_33 = arith.constant 0.000000e+00 : f32
    %54 = vector.broadcast %cst_33 : f32 to vector<34x16xf32>
    %55 = arith.maximumf %53, %54 : vector<34x16xf32>
    %56 = vector.extract_strided_slice %22 {offsets = [0, 0], sizes = [34, 32], strides = [1, 1]} : vector<100x32xf32> to vector<34x32xf32>
    %57 = vector.extract_strided_slice %22 {offsets = [3, 0], sizes = [34, 32], strides = [1, 1]} : vector<100x32xf32> to vector<34x32xf32>
    %58 = vector.extract_strided_slice %22 {offsets = [6, 0], sizes = [34, 32], strides = [1, 1]} : vector<100x32xf32> to vector<34x32xf32>
    %59 = vector.extract_strided_slice %22 {offsets = [30, 0], sizes = [34, 32], strides = [1, 1]} : vector<100x32xf32> to vector<34x32xf32>
    %60 = vector.extract_strided_slice %22 {offsets = [33, 0], sizes = [34, 32], strides = [1, 1]} : vector<100x32xf32> to vector<34x32xf32>
    %61 = vector.extract_strided_slice %22 {offsets = [36, 0], sizes = [34, 32], strides = [1, 1]} : vector<100x32xf32> to vector<34x32xf32>
    %62 = vector.extract_strided_slice %22 {offsets = [60, 0], sizes = [34, 32], strides = [1, 1]} : vector<100x32xf32> to vector<34x32xf32>
    %63 = vector.extract_strided_slice %22 {offsets = [63, 0], sizes = [34, 32], strides = [1, 1]} : vector<100x32xf32> to vector<34x32xf32>
    %64 = vector.extract_strided_slice %22 {offsets = [66, 0], sizes = [34, 32], strides = [1, 1]} : vector<100x32xf32> to vector<34x32xf32>
    %65 = tpu.concatenate %56, %57, %58, %59, %60, %61, %62, %63, %64 in 1 : vector<34x32xf32>, vector<34x32xf32>, vector<34x32xf32>, vector<34x32xf32>, vector<34x32xf32>, vector<34x32xf32>, vector<34x32xf32>, vector<34x32xf32>, vector<34x32xf32> -> vector<34x288xf32>
    %66 = arith.truncf %65 : vector<34x288xf32> to vector<34x288xbf16>
    %c0_34 = arith.constant 0 : index
    %c0_35 = arith.constant 0 : index
    %67 = vector.load %arg11[%c0_34, %c0_35] : memref<288x16xbf16, #tpu.memory_space<vmem>>, vector<288x16xbf16>
    %cst_36 = arith.constant dense<0.000000e+00> : vector<34x16xf32>
    %68 = tpu.matmul %66, %67, %cst_36 {dimension_numbers = #tpu.dot_dimension_numbers<[1], [0], [0], [1], [0, 0, 1, 1], [], []>} : vector<34x288xbf16>, vector<288x16xbf16>, vector<34x16xf32> -> vector<34x16xf32>
    %c0_37 = arith.constant 0 : index
    %c0_38 = arith.constant 0 : index
    %69 = vector.load %arg12[%c0_37, %c0_38] : memref<1x16xf32, #tpu.memory_space<vmem>>, vector<1x16xf32>
    %70 = vector.broadcast %69 : vector<1x16xf32> to vector<34x16xf32>
    %71 = arith.mulf %68, %70 : vector<34x16xf32>
    %c0_39 = arith.constant 0 : index
    %c0_40 = arith.constant 0 : index
    %72 = vector.load %arg13[%c0_39, %c0_40] : memref<1x16xf32, #tpu.memory_space<vmem>>, vector<1x16xf32>
    %73 = vector.broadcast %72 : vector<1x16xf32> to vector<34x16xf32>
    %74 = arith.addf %71, %73 : vector<34x16xf32>
    %cst_41 = arith.constant 0.000000e+00 : f32
    %75 = vector.broadcast %cst_41 : f32 to vector<34x16xf32>
    %76 = arith.maximumf %74, %75 : vector<34x16xf32>
    %cst_42 = arith.constant dense<0.000000e+00> : vector<32xf32>
    %77 = vector.multi_reduction <add>, %23, %cst_42 [0] : vector<34x32xf32> to vector<32xf32>
    %78 = vector.shape_cast %77 : vector<32xf32> to vector<1x32xf32>
    %cst_43 = arith.constant 6.250000e-02 : f32
    %79 = vector.broadcast %cst_43 : f32 to vector<1x32xf32>
    %80 = arith.mulf %78, %79 : vector<1x32xf32>
    %81 = arith.truncf %80 : vector<1x32xf32> to vector<1x32xbf16>
    %c0_44 = arith.constant 0 : index
    %c0_45 = arith.constant 0 : index
    %82 = vector.load %arg14[%c0_44, %c0_45] : memref<32x16xbf16, #tpu.memory_space<vmem>>, vector<32x16xbf16>
    %cst_46 = arith.constant dense<0.000000e+00> : vector<1x16xf32>
    %83 = tpu.matmul %81, %82, %cst_46 {dimension_numbers = #tpu.dot_dimension_numbers<[1], [0], [0], [1], [0, 0, 1, 1], [], []>} : vector<1x32xbf16>, vector<32x16xbf16>, vector<1x16xf32> -> vector<1x16xf32>
    %c0_47 = arith.constant 0 : index
    %c0_48 = arith.constant 0 : index
    %84 = vector.load %arg15[%c0_47, %c0_48] : memref<1x16xf32, #tpu.memory_space<vmem>>, vector<1x16xf32>
    %85 = arith.mulf %83, %84 : vector<1x16xf32>
    %c0_49 = arith.constant 0 : index
    %c0_50 = arith.constant 0 : index
    %86 = vector.load %arg16[%c0_49, %c0_50] : memref<1x16xf32, #tpu.memory_space<vmem>>, vector<1x16xf32>
    %87 = arith.addf %85, %86 : vector<1x16xf32>
    %cst_51 = arith.constant 0.000000e+00 : f32
    %88 = vector.broadcast %cst_51 : f32 to vector<1x16xf32>
    %89 = arith.maximumf %87, %88 : vector<1x16xf32>
    %90 = tpu.concatenate %34, %55, %76 in 1 : vector<34x16xf32>, vector<34x16xf32>, vector<34x16xf32> -> vector<34x48xf32>
    %91 = arith.truncf %90 : vector<34x48xf32> to vector<34x48xbf16>
    %c0_52 = arith.constant 0 : index
    %c0_53 = arith.constant 0 : index
    %92 = vector.load %arg17[%c0_52, %c0_53] : memref<48x16xbf16, #tpu.memory_space<vmem>>, vector<48x16xbf16>
    %cst_54 = arith.constant dense<0.000000e+00> : vector<34x16xf32>
    %93 = tpu.matmul %91, %92, %cst_54 {dimension_numbers = #tpu.dot_dimension_numbers<[1], [0], [0], [1], [0, 0, 1, 1], [], []>} : vector<34x48xbf16>, vector<48x16xbf16>, vector<34x16xf32> -> vector<34x16xf32>
    %94 = arith.truncf %89 : vector<1x16xf32> to vector<1x16xbf16>
    %c0_55 = arith.constant 0 : index
    %c0_56 = arith.constant 0 : index
    %95 = vector.load %arg18[%c0_55, %c0_56] : memref<16x16xbf16, #tpu.memory_space<vmem>>, vector<16x16xbf16>
    %cst_57 = arith.constant dense<0.000000e+00> : vector<1x16xf32>
    %96 = tpu.matmul %94, %95, %cst_57 {dimension_numbers = #tpu.dot_dimension_numbers<[1], [0], [0], [1], [0, 0, 1, 1], [], []>} : vector<1x16xbf16>, vector<16x16xbf16>, vector<1x16xf32> -> vector<1x16xf32>
    %97 = vector.broadcast %96 : vector<1x16xf32> to vector<34x16xf32>
    %98 = arith.addf %93, %97 : vector<34x16xf32>
    %c0_58 = arith.constant 0 : index
    %c0_59 = arith.constant 0 : index
    %99 = vector.load %arg19[%c0_58, %c0_59] : memref<1x16xf32, #tpu.memory_space<vmem>>, vector<1x16xf32>
    %100 = vector.broadcast %99 : vector<1x16xf32> to vector<34x16xf32>
    %101 = arith.mulf %98, %100 : vector<34x16xf32>
    %c0_60 = arith.constant 0 : index
    %c0_61 = arith.constant 0 : index
    %102 = vector.load %arg20[%c0_60, %c0_61] : memref<1x16xf32, #tpu.memory_space<vmem>>, vector<1x16xf32>
    %103 = vector.broadcast %102 : vector<1x16xf32> to vector<34x16xf32>
    %104 = arith.addf %101, %103 : vector<34x16xf32>
    %cst_62 = arith.constant 0.000000e+00 : f32
    %105 = vector.broadcast %cst_62 : f32 to vector<34x16xf32>
    %106 = arith.maximumf %104, %105 : vector<34x16xf32>
    %107 = arith.truncf %106 : vector<34x16xf32> to vector<34x16xbf16>
    %c0_63 = arith.constant 0 : index
    %c0_64 = arith.constant 0 : index
    %108 = vector.load %arg21[%c0_63, %c0_64] : memref<16x8xbf16, #tpu.memory_space<vmem>>, vector<16x8xbf16>
    %cst_65 = arith.constant dense<0.000000e+00> : vector<34x8xf32>
    %109 = tpu.matmul %107, %108, %cst_65 {dimension_numbers = #tpu.dot_dimension_numbers<[1], [0], [0], [1], [0, 0, 1, 1], [], []>} : vector<34x16xbf16>, vector<16x8xbf16>, vector<34x8xf32> -> vector<34x8xf32>
    %c0_66 = arith.constant 0 : index
    %c0_67 = arith.constant 0 : index
    %110 = vector.load %arg22[%c0_66, %c0_67] : memref<1x8xf32, #tpu.memory_space<vmem>>, vector<1x8xf32>
    %111 = vector.broadcast %110 : vector<1x8xf32> to vector<34x8xf32>
    %112 = arith.addf %109, %111 : vector<34x8xf32>
    %113 = arith.truncf %112 : vector<34x8xf32> to vector<34x8xbf16>
    %c0_68 = arith.constant 0 : index
    %c0_69 = arith.constant 0 : index
    %c0_70 = arith.constant 0 : index
    %114 = vector.load %arg23[%c0_68, %c0_69, %c0_70] : memref<1x34x8xbf16, #tpu.memory_space<vmem>>, vector<1x34x8xbf16>
    %115 = vector.shape_cast %114 : vector<1x34x8xbf16> to vector<34x8xbf16>
    %116 = vector.shape_cast %113 : vector<34x8xbf16> to vector<1x34x8xbf16>
    tpu.vector_store %arg23[%c0_68, %c0_69, %c0_70], %116 {strides = array<i32>} : memref<1x34x8xbf16, #tpu.memory_space<vmem>>, vector<1x34x8xbf16>,
    return
  }
  func.func @transform_0(%arg0: i32) -> (i32, i32, i32) {
    %c0_i32 = arith.constant 0 : i32
    %c0_i32_0 = arith.constant 0 : i32
    %c0_i32_1 = arith.constant 0 : i32
    return %arg0, %c0_i32, %c0_i32_0 : i32, i32, i32
  }
  func.func @transform_1(%arg0: i32) -> (i32, i32) {
    %c0_i32 = arith.constant 0 : i32
    %c0_i32_0 = arith.constant 0 : i32
    %c0_i32_1 = arith.constant 0 : i32
    return %c0_i32, %c0_i32_0 : i32, i32
  }
  func.func @transform_2(%arg0: i32) -> (i32, i32) {
    %c0_i32 = arith.constant 0 : i32
    %c0_i32_0 = arith.constant 0 : i32
    %c0_i32_1 = arith.constant 0 : i32
    return %c0_i32, %c0_i32_0 : i32, i32
  }
  func.func @transform_3(%arg0: i32) -> (i32, i32) {
    %c0_i32 = arith.constant 0 : i32
    %c0_i32_0 = arith.constant 0 : i32
    %c0_i32_1 = arith.constant 0 : i32
    return %c0_i32, %c0_i32_0 : i32, i32
  }
  func.func @transform_4(%arg0: i32) -> (i32, i32) {
    %c0_i32 = arith.constant 0 : i32
    %c0_i32_0 = arith.constant 0 : i32
    %c0_i32_1 = arith.constant 0 : i32
    return %c0_i32, %c0_i32_0 : i32, i32
  }
  func.func @transform_5(%arg0: i32) -> (i32, i32) {
    %c0_i32 = arith.constant 0 : i32
    %c0_i32_0 = arith.constant 0 : i32
    %c0_i32_1 = arith.constant 0 : i32
    return %c0_i32, %c0_i32_0 : i32, i32
  }
  func.func @transform_6(%arg0: i32) -> (i32, i32) {
    %c0_i32 = arith.constant 0 : i32
    %c0_i32_0 = arith.constant 0 : i32
    %c0_i32_1 = arith.constant 0 : i32
    return %c0_i32, %c0_i32_0 : i32, i32
  }
  func.func @transform_7(%arg0: i32) -> (i32, i32) {
    %c0_i32 = arith.constant 0 : i32
    %c0_i32_0 = arith.constant 0 : i32
    %c0_i32_1 = arith.constant 0 : i32
    return %c0_i32, %c0_i32_0 : i32, i32
  }
  func.func @transform_8(%arg0: i32) -> (i32, i32) {
    %c0_i32 = arith.constant 0 : i32
    %c0_i32_0 = arith.constant 0 : i32
    %c0_i32_1 = arith.constant 0 : i32
    return %c0_i32, %c0_i32_0 : i32, i32
  }
  func.func @transform_9(%arg0: i32) -> (i32, i32) {
    %c0_i32 = arith.constant 0 : i32
    %c0_i32_0 = arith.constant 0 : i32
    %c0_i32_1 = arith.constant 0 : i32
    return %c0_i32, %c0_i32_0 : i32, i32
  }
  func.func @transform_10(%arg0: i32) -> (i32, i32) {
    %c0_i32 = arith.constant 0 : i32
    %c0_i32_0 = arith.constant 0 : i32
    %c0_i32_1 = arith.constant 0 : i32
    return %c0_i32, %c0_i32_0 : i32, i32
  }
  func.func @transform_11(%arg0: i32) -> (i32, i32) {
    %c0_i32 = arith.constant 0 : i32
    %c0_i32_0 = arith.constant 0 : i32
    %c0_i32_1 = arith.constant 0 : i32
    return %c0_i32, %c0_i32_0 : i32, i32
  }
  func.func @transform_12(%arg0: i32) -> (i32, i32) {
    %c0_i32 = arith.constant 0 : i32
    %c0_i32_0 = arith.constant 0 : i32
    %c0_i32_1 = arith.constant 0 : i32
    return %c0_i32, %c0_i32_0 : i32, i32
  }
  func.func @transform_13(%arg0: i32) -> (i32, i32) {
    %c0_i32 = arith.constant 0 : i32
    %c0_i32_0 = arith.constant 0 : i32
    %c0_i32_1 = arith.constant 0 : i32
    return %c0_i32, %c0_i32_0 : i32, i32
  }
  func.func @transform_14(%arg0: i32) -> (i32, i32) {
    %c0_i32 = arith.constant 0 : i32
    %c0_i32_0 = arith.constant 0 : i32
    %c0_i32_1 = arith.constant 0 : i32
    return %c0_i32, %c0_i32_0 : i32, i32
  }
  func.func @transform_15(%arg0: i32) -> (i32, i32) {
    %c0_i32 = arith.constant 0 : i32
    %c0_i32_0 = arith.constant 0 : i32
    %c0_i32_1 = arith.constant 0 : i32
    return %c0_i32, %c0_i32_0 : i32, i32
  }
  func.func @transform_16(%arg0: i32) -> (i32, i32) {
    %c0_i32 = arith.constant 0 : i32
    %c0_i32_0 = arith.constant 0 : i32
    %c0_i32_1 = arith.constant 0 : i32
    return %c0_i32, %c0_i32_0 : i32, i32
  }
  func.func @transform_17(%arg0: i32) -> (i32, i32) {
    %c0_i32 = arith.constant 0 : i32
    %c0_i32_0 = arith.constant 0 : i32
    %c0_i32_1 = arith.constant 0 : i32
    return %c0_i32, %c0_i32_0 : i32, i32
  }
  func.func @transform_18(%arg0: i32) -> (i32, i32) {
    %c0_i32 = arith.constant 0 : i32
    %c0_i32_0 = arith.constant 0 : i32
    %c0_i32_1 = arith.constant 0 : i32
    return %c0_i32, %c0_i32_0 : i32, i32
  }
  func.func @transform_19(%arg0: i32) -> (i32, i32) {
    %c0_i32 = arith.constant 0 : i32
    %c0_i32_0 = arith.constant 0 : i32
    %c0_i32_1 = arith.constant 0 : i32
    return %c0_i32, %c0_i32_0 : i32, i32
  }
  func.func @transform_20(%arg0: i32) -> (i32, i32) {
    %c0_i32 = arith.constant 0 : i32
    %c0_i32_0 = arith.constant 0 : i32
    %c0_i32_1 = arith.constant 0 : i32
    return %c0_i32, %c0_i32_0 : i32, i32
  }
  func.func @transform_21(%arg0: i32) -> (i32, i32) {
    %c0_i32 = arith.constant 0 : i32
    %c0_i32_0 = arith.constant 0 : i32
    %c0_i32_1 = arith.constant 0 : i32
    return %c0_i32, %c0_i32_0 : i32, i32
  }
  func.func @transform_22(%arg0: i32) -> (i32, i32, i32) {
    %c0_i32 = arith.constant 0 : i32
    %c0_i32_0 = arith.constant 0 : i32
    %c0_i32_1 = arith.constant 0 : i32
    return %arg0, %c0_i32, %c0_i32_0 : i32, i32, i32
  }
}

</mosaic_0001>

<llo_original>
// kernel: deeplabv3_wrapper_forward.2
$region0: #{deeplabv3_wrapper_forward.2}
  #allocation0 [shape = 'u32[]', space=smem, size = 0x4, offset = 0x4, fixed_abs, tag = 'smem constant byte address 0x4 - core index']
  #allocation1 [shape = 'u32[72,128]{1,0:T(1,128)}', space=vmem, size = 0x9000, scoped, tag = 'internal scratch']
  %s0 = inlined_call_operand.vmem [shape: bf16[128,36], index: 0, kind: input, shape index: {}]
  %s1 = inlined_call_operand.vmem [shape: bf16[36,16], index: 1, kind: input, shape index: {}]
  %s2 = inlined_call_operand.vmem [shape: f32[1,16], index: 2, kind: input, shape index: {}]
  %s3 = inlined_call_operand.vmem [shape: f32[1,16], index: 3, kind: input, shape index: {}]
  %s4 = inlined_call_operand.vmem [shape: bf16[128,16], index: 4, kind: output, shape index: {}]
  %s5 = sld [smem:[#allocation0]]
  $region26: #{deeplabv3_wrapper_forward.2} parent=0
    _
  %s7 = ssub.s32 1, %s5
  %s8 = scalar_select 0, %s7, %s5
  // Predicated region
  $region2: #{deeplabv3_wrapper_forward.2} parent=0 // pred_check
    _
  $region3: #{deeplabv3_wrapper_forward.2} parent=0 // pred_check_branch
    %10 = sbr.rel (0) target = $region5
  $region4: #{deeplabv3_wrapper_forward.2} parent=0 // pred_region
    _
  $region5: #{deeplabv3_wrapper_forward.2} parent=0 // pred_fallthru
    _
  // Predicated region
  $region6: #{deeplabv3_wrapper_forward.2} parent=0 // pred_check
    _
  $region7: #{deeplabv3_wrapper_forward.2} parent=0 // pred_check_branch
    %12 = sbr.rel (0) target = $region9
  $region8: #{deeplabv3_wrapper_forward.2} parent=0 // pred_region
    _
  $region9: #{deeplabv3_wrapper_forward.2} parent=0 // pred_fallthru
    _
  // Predicated region
  $region10: #{deeplabv3_wrapper_forward.2} parent=0 // pred_check
    _
  $region11: #{deeplabv3_wrapper_forward.2} parent=0 // pred_check_branch
    %14 = sbr.rel (0) target = $region13
  $region12: #{deeplabv3_wrapper_forward.2} parent=0 // pred_region
    _
  $region13: #{deeplabv3_wrapper_forward.2} parent=0 // pred_fallthru
    _
  // Predicated region
  $region14: #{deeplabv3_wrapper_forward.2} parent=0 // pred_check
    _
  $region15: #{deeplabv3_wrapper_forward.2} parent=0 // pred_check_branch
    %16 = sbr.rel (0) target = $region17
  $region16: #{deeplabv3_wrapper_forward.2} parent=0 // pred_region
    _
  $region17: #{deeplabv3_wrapper_forward.2} parent=0 // pred_fallthru
    _
  %v18 = vld [vmem:[%s0] sm:$0xf]
  %v19 = vld [vmem:[%s0 + $0x4] sm:$0xf]
  %v20 = vld [vmem:[%s0 + $0x8] sm:$0xf]
  %v21 = vld [vmem:[%s0 + $0xc] sm:$0xf]
  %v22 = vld [vmem:[%s0 + $0x10] sm:$0xf]
  %v23 = vld [vmem:[%s0 + $0x14] sm:$0xf]
  %v24 = vld [vmem:[%s0 + $0x18] sm:$0xf]
  %v25 = vld [vmem:[%s0 + $0x1c] sm:$0xf]
  %v26 = vld [vmem:[%s0 + $0x20] sm:$0xf]
  %v27 = vld [vmem:[%s0 + $0x24] sm:$0xf]
  %v28 = vld [vmem:[%s0 + $0x28] sm:$0xf]
  %v29 = vld [vmem:[%s0 + $0x2c] sm:$0xf]
  %v30 = vld [vmem:[%s0 + $0x30] sm:$0xf]
  %v31 = vld [vmem:[%s0 + $0x34] sm:$0xf]
  %v32 = vld [vmem:[%s0 + $0x38] sm:$0xf]
  %v33 = vld [vmem:[%s0 + $0x3c] sm:$0xf]
  %v34 = vld [vmem:[%s1] sm:$0xf]
  %v35 = vld [vmem:[%s1 + $0x4] sm:$0xf]
  %v36 = vld [vmem:[%s1 + $0x8] sm:$0xf]
  %v37 = vld [vmem:[%s1 + $0xc] sm:$0xf]
  %v38 = vld [vmem:[%s1 + $0x10] sm:$0x3]
  %v55 = vunpack.c.l.b16 %v18
  %v56 = vunpack.c.l.b16 %v19
  %v57 = vunpack.c.l.b16 %v20
  %v58 = vunpack.c.l.b16 %v21
  %v59 = vunpack.c.l.b16 %v22
  %v60 = vunpack.c.l.b16 %v23
  %v61 = vunpack.c.l.b16 %v24
  %v62 = vunpack.c.l.b16 %v25
  %v63 = vunpack.c.l.b16 %v26
  %v64 = vunpack.c.l.b16 %v27
  %v65 = vunpack.c.l.b16 %v28
  %v66 = vunpack.c.l.b16 %v29
  %v67 = vunpack.c.l.b16 %v30
  %v68 = vunpack.c.l.b16 %v31
  %v69 = vunpack.c.l.b16 %v32
  %v70 = vunpack.c.l.b16 %v33
  %v71 = vpack.c.b16 %v56, %v55
  %v72 = vpack.c.b16 %v58, %v57
  %v73 = vpack.c.b16 %v60, %v59
  %v74 = vpack.c.b16 %v62, %v61
  %v75 = vpack.c.b16 %v64, %v63
  %v76 = vpack.c.b16 %v66, %v65
  %v77 = vpack.c.b16 %v68, %v67
  %v78 = vpack.c.b16 %v70, %v69
  %v84 = vunpack.c.l.b16 %v34
  %v85 = vunpack.c.l.b16 %v35
  %v86 = vunpack.c.l.b16 %v36
  %v87 = vunpack.c.l.b16 %v37
  %v88 = vunpack.c.l.b16 %v38
  %v89 = vpack.c.b16 %v85, %v84
  %v90 = vpack.c.b16 %v87, %v86
  %v91 = vpack.c.b16 %v88, %v88
  %vm94 = vcmask 293888
  %v96 = vsel %vm94, %v71, 0
  %v99 = vsel %vm94, %v72, 0
  %v102 = vsel %vm94, %v73, 0
  %v105 = vsel %vm94, %v74, 0
  %v108 = vsel %vm94, %v75, 0
  %v111 = vsel %vm94, %v76, 0
  %v114 = vsel %vm94, %v77, 0
  %v117 = vsel %vm94, %v78, 0
  %vm119 = vcmask 1041408
  %v121 = vsel %vm119, %v91, 0
  %123 = vmatpush.bf16.msra.mxu0 0
  %124 = vmatpush.bf16.msra.mxu0 0
  %125 = vmatpush.bf16.msra.mxu0 0
  %126 = vmatpush.bf16.msra.mxu0 0
  %127 = vmatpush.bf16.msra.mxu0 0
  %128 = vmatpush.bf16.msra.mxu0 %v121
  %129 = vmatpush.bf16.msra.mxu0 %v90
  %130 = vmatpush.bf16.msra.mxu0 %v89
  %131 = vmatmul.bf16.gmra.mxu0 %v96
  %v132 = vpop.f32.mrf.mxu0
  %v133 = vadd.f32 0.0, %v132
  %v134 = vpop.f32.mrf.mxu0
  %v135 = vadd.f32 0.0, %v134
  %136 = vmatmul.bf16.gmra.mxu0 %v99
  %v137 = vpop.f32.mrf.mxu0
  %v138 = vadd.f32 0.0, %v137
  %v139 = vpop.f32.mrf.mxu0
  %v140 = vadd.f32 0.0, %v139
  %141 = vmatmul.bf16.gmra.mxu0 %v102
  %v142 = vpop.f32.mrf.mxu0
  %v143 = vadd.f32 0.0, %v142
  %v144 = vpop.f32.mrf.mxu0
  %v145 = vadd.f32 0.0, %v144
  %146 = vmatmul.bf16.gmra.mxu0 %v105
  %v147 = vpop.f32.mrf.mxu0
  %v148 = vadd.f32 0.0, %v147
  %v149 = vpop.f32.mrf.mxu0
  %v150 = vadd.f32 0.0, %v149
  %151 = vmatmul.bf16.gmra.mxu0 %v108
  %v152 = vpop.f32.mrf.mxu0
  %v153 = vadd.f32 0.0, %v152
  %v154 = vpop.f32.mrf.mxu0
  %v155 = vadd.f32 0.0, %v154
  %156 = vmatmul.bf16.gmra.mxu0 %v111
  %v157 = vpop.f32.mrf.mxu0
  %v158 = vadd.f32 0.0, %v157
  %v159 = vpop.f32.mrf.mxu0
  %v160 = vadd.f32 0.0, %v159
  %161 = vmatmul.bf16.gmra.mxu0 %v114
  %v162 = vpop.f32.mrf.mxu0
  %v163 = vadd.f32 0.0, %v162
  %v164 = vpop.f32.mrf.mxu0
  %v165 = vadd.f32 0.0, %v164
  %166 = vmatmul.bf16.gmra.mxu0 %v117
  %v167 = vpop.f32.mrf.mxu0
  %v168 = vadd.f32 0.0, %v167
  %v169 = vpop.f32.mrf.mxu0
  %v170 = vadd.f32 0.0, %v169
  %171 = vdwg.mxu0
  %v172 = vld [vmem:[%s2] sm:$0x1]
  %v174 = vperm.slane %v172, 0
  %v176 = vmul.f32 %v133, %v174
  %v177 = vmul.f32 %v135, %v174
  %v178 = vmul.f32 %v138, %v174
  %v179 = vmul.f32 %v140, %v174
  %v180 = vmul.f32 %v143, %v174
  %v181 = vmul.f32 %v145, %v174
  %v182 = vmul.f32 %v148, %v174
  %v183 = vmul.f32 %v150, %v174
  %v184 = vmul.f32 %v153, %v174
  %v185 = vmul.f32 %v155, %v174
  %v186 = vmul.f32 %v158, %v174
  %v187 = vmul.f32 %v160, %v174
  %v188 = vmul.f32 %v163, %v174
  %v189 = vmul.f32 %v165, %v174
  %v190 = vmul.f32 %v168, %v174
  %v191 = vmul.f32 %v170, %v174
  %v192 = vld [vmem:[%s3] sm:$0x1]
  %v194 = vperm.slane %v192, 0
  %v196 = vadd.f32 %v176, %v194
  %v197 = vadd.f32 %v177, %v194
  %v198 = vadd.f32 %v178, %v194
  %v199 = vadd.f32 %v179, %v194
  %v200 = vadd.f32 %v180, %v194
  %v201 = vadd.f32 %v181, %v194
  %v202 = vadd.f32 %v182, %v194
  %v203 = vadd.f32 %v183, %v194
  %v204 = vadd.f32 %v184, %v194
  %v205 = vadd.f32 %v185, %v194
  %v206 = vadd.f32 %v186, %v194
  %v207 = vadd.f32 %v187, %v194
  %v208 = vadd.f32 %v188, %v194
  %v209 = vadd.f32 %v189, %v194
  %v210 = vadd.f32 %v190, %v194
  %v211 = vadd.f32 %v191, %v194
  %v212 = vmax.f32 %v196, 0.0
  %v213 = vmax.f32 %v197, 0.0
  %v214 = vmax.f32 %v198, 0.0
  %v215 = vmax.f32 %v199, 0.0
  %v216 = vmax.f32 %v200, 0.0
  %v217 = vmax.f32 %v201, 0.0
  %v218 = vmax.f32 %v202, 0.0
  %v219 = vmax.f32 %v203, 0.0
  %v220 = vmax.f32 %v204, 0.0
  %v221 = vmax.f32 %v205, 0.0
  %v222 = vmax.f32 %v206, 0.0
  %v223 = vmax.f32 %v207, 0.0
  %v224 = vmax.f32 %v208, 0.0
  %v225 = vmax.f32 %v209, 0.0
  %v226 = vmax.f32 %v210, 0.0
  %v227 = vmax.f32 %v211, 0.0
  %v228 = vpack.c.bf16 %v212, %v212
  %v229 = vpack.c.bf16 %v213, %v213
  %v230 = vpack.c.bf16 %v214, %v214
  %v231 = vpack.c.bf16 %v215, %v215
  %v232 = vpack.c.bf16 %v216, %v216
  %v233 = vpack.c.bf16 %v217, %v217
  %v234 = vpack.c.bf16 %v218, %v218
  %v235 = vpack.c.bf16 %v219, %v219
  %v236 = vpack.c.bf16 %v220, %v220
  %v237 = vpack.c.bf16 %v221, %v221
  %v238 = vpack.c.bf16 %v222, %v222
  %v239 = vpack.c.bf16 %v223, %v223
  %v240 = vpack.c.bf16 %v224, %v224
  %v241 = vpack.c.bf16 %v225, %v225
  %v242 = vpack.c.bf16 %v226, %v226
  %v243 = vpack.c.bf16 %v227, %v227
  %vm244 = vcmask 125952
  %245 = vst.msk [vmem:[%s4] sm:$0xf] %vm244, %v228
  %246 = vst.msk [vmem:[%s4 + $0x4] sm:$0xf] %vm244, %v229
  %247 = vst.msk [vmem:[%s4 + $0x8] sm:$0xf] %vm244, %v230
  %248 = vst.msk [vmem:[%s4 + $0xc] sm:$0xf] %vm244, %v231
  %249 = vst.msk [vmem:[%s4 + $0x10] sm:$0xf] %vm244, %v232
  %250 = vst.msk [vmem:[%s4 + $0x14] sm:$0xf] %vm244, %v233
  %251 = vst.msk [vmem:[%s4 + $0x18] sm:$0xf] %vm244, %v234
  %252 = vst.msk [vmem:[%s4 + $0x1c] sm:$0xf] %vm244, %v235
  %253 = vst.msk [vmem:[%s4 + $0x20] sm:$0xf] %vm244, %v236
  %254 = vst.msk [vmem:[%s4 + $0x24] sm:$0xf] %vm244, %v237
  %255 = vst.msk [vmem:[%s4 + $0x28] sm:$0xf] %vm244, %v238
  %256 = vst.msk [vmem:[%s4 + $0x2c] sm:$0xf] %vm244, %v239
  %257 = vst.msk [vmem:[%s4 + $0x30] sm:$0xf] %vm244, %v240
  %258 = vst.msk [vmem:[%s4 + $0x34] sm:$0xf] %vm244, %v241
  %259 = vst.msk [vmem:[%s4 + $0x38] sm:$0xf] %vm244, %v242
  %260 = vst.msk [vmem:[%s4 + $0x3c] sm:$0xf] %vm244, %v243
  // Predicated region
  $region18: #{deeplabv3_wrapper_forward.2} parent=0 // pred_check
    _
  $region19: #{deeplabv3_wrapper_forward.2} parent=0 // pred_check_branch
    %262 = sbr.rel (0) target = $region21
  $region20: #{deeplabv3_wrapper_forward.2} parent=0 // pred_region
    _
  $region21: #{deeplabv3_wrapper_forward.2} parent=0 // pred_fallthru
    _
  // Predicated region
  $region22: #{deeplabv3_wrapper_forward.2} parent=0 // pred_check
    _
  $region23: #{deeplabv3_wrapper_forward.2} parent=0 // pred_check_branch
    %264 = sbr.rel (0) target = $region25
  $region24: #{deeplabv3_wrapper_forward.2} parent=0 // pred_region
    _
  $region25: #{deeplabv3_wrapper_forward.2} parent=0 // pred_fallthru
    _

// kernel: deeplabv3_wrapper_forward.3
$region0: #{deeplabv3_wrapper_forward.3}
  #allocation0 [shape = 'u32[]', space=smem, size = 0x4, offset = 0x4, fixed_abs, tag = 'smem constant byte address 0x4 - core index']
  #allocation1 [shape = 'u32[72,128]{1,0:T(1,128)}', space=vmem, size = 0x9000, scoped, tag = 'internal scratch']
  #allocation2 [shape = 'f32[100,32]{1,0:T(8,128)}', space=vmem, size = 0xd000, scoped, tag = 'scratch operand']
  %s0 = inlined_call_operand.vmem [shape: bf16[2,16,144], index: 0, kind: input, shape index: {}]
  %s1 = inlined_call_operand.vmem [shape: bf16[144,32], index: 1, kind: input, shape index: {}]
  %s2 = inlined_call_operand.vmem [shape: f32[1,32], index: 2, kind: input, shape index: {}]
  %s3 = inlined_call_operand.vmem [shape: f32[1,32], index: 3, kind: input, shape index: {}]
  %s4 = inlined_call_operand.vmem [shape: bf16[32,16], index: 4, kind: input, shape index: {}]
  %s5 = inlined_call_operand.vmem [shape: f32[1,16], index: 5, kind: input, shape index: {}]
  %s6 = inlined_call_operand.vmem [shape: f32[1,16], index: 6, kind: input, shape index: {}]
  %s7 = inlined_call_operand.vmem [shape: bf16[288,16], index: 7, kind: input, shape index: {}]
  %s8 = inlined_call_operand.vmem [shape: f32[1,16], index: 8, kind: input, shape index: {}]
  %s9 = inlined_call_operand.vmem [shape: f32[1,16], index: 9, kind: input, shape index: {}]
  %s10 = inlined_call_operand.vmem [shape: bf16[288,16], index: 10, kind: input, shape index: {}]
  %s11 = inlined_call_operand.vmem [shape: f32[1,16], index: 11, kind: input, shape index: {}]
  %s12 = inlined_call_operand.vmem [shape: f32[1,16], index: 12, kind: input, shape index: {}]
  %s13 = inlined_call_operand.vmem [shape: bf16[32,16], index: 13, kind: input, shape index: {}]
  %s14 = inlined_call_operand.vmem [shape: f32[1,16], index: 14, kind: input, shape index: {}]
  %s15 = inlined_call_operand.vmem [shape: f32[1,16], index: 15, kind: input, shape index: {}]
  %s16 = inlined_call_operand.vmem [shape: bf16[48,16], index: 16, kind: input, shape index: {}]
  %s17 = inlined_call_operand.vmem [shape: bf16[16,16], index: 17, kind: input, shape index: {}]
  %s18 = inlined_call_operand.vmem [shape: f32[1,16], index: 18, kind: input, shape index: {}]
  %s19 = inlined_call_operand.vmem [shape: f32[1,16], index: 19, kind: input, shape index: {}]
  %s20 = inlined_call_operand.vmem [shape: bf16[16,8], index: 20, kind: input, shape index: {}]
  %s21 = inlined_call_operand.vmem [shape: f32[1,8], index: 21, kind: input, shape index: {}]
  %s22 = inlined_call_operand.vmem [shape: bf16[2,34,8], index: 22, kind: output, shape index: {}]
  %s23 = sld [smem:[#allocation0]]
  $region121: #{deeplabv3_wrapper_forward.3} parent=0
    _
  %s25 = ssub.s32 1, %s23
  %s26 = scalar_select 0, %s25, %s23
  loop: start=0, step=1, limit=4
  $region2: #{deeplabv3_wrapper_forward.3} parent=0 // loop_pre_header
    _
  $region3: #{deeplabv3_wrapper_forward.3} parent=0 // loop_header
    %s28 = sphi 0, %s32
    %p29 = scmp.ge.s32.totalorder %s28, 4
    %s38 = sphi 0, %s40
    %s41 = sphi 0, %s38
    %s42 = sphi 0, %s41
    %s58 = sphi 0, %s42
    %s62 = sphi 0, %s62
    %s64 = sphi 0, %s62
    %s65 = sphi 0, %s64
    %s79 = sphi 0, %s65
    %s83 = sphi 0, %s83
    %s85 = sphi 0, %s83
    %s86 = sphi 0, %s85
    %s100 = sphi 0, %s86
    %s104 = sphi 0, %s104
    %s106 = sphi 0, %s104
    %s107 = sphi 0, %s106
    %s121 = sphi 0, %s107
    %s125 = sphi 0, %s125
    %s127 = sphi 0, %s125
    %s128 = sphi 0, %s127
    %s142 = sphi 0, %s128
    %s146 = sphi 0, %s146
    %s148 = sphi 0, %s146
    %s149 = sphi 0, %s148
    %s163 = sphi 0, %s149
    %s167 = sphi 0, %s167
    %s169 = sphi 0, %s167
    %s170 = sphi 0, %s169
    %s184 = sphi 0, %s170
    %s188 = sphi 0, %s188
    %s190 = sphi 0, %s188
    %s191 = sphi 0, %s190
    %s205 = sphi 0, %s191
    %s209 = sphi 0, %s209
    %s211 = sphi 0, %s209
    %s212 = sphi 0, %s211
    %s226 = sphi 0, %s212
    %s230 = sphi 0, %s230
    %s232 = sphi 0, %s230
    %s233 = sphi 0, %s232
    %s247 = sphi 0, %s233
    %s251 = sphi 0, %s251
    %s253 = sphi 0, %s251
    %s254 = sphi 0, %s253
    %s268 = sphi 0, %s254
    %s272 = sphi 0, %s272
    %s274 = sphi 0, %s272
    %s275 = sphi 0, %s274
    %s289 = sphi 0, %s275
    %s293 = sphi 0, %s293
    %s295 = sphi 0, %s293
    %s296 = sphi 0, %s295
    %s310 = sphi 0, %s296
    %s314 = sphi 0, %s314
    %s316 = sphi 0, %s314
    %s317 = sphi 0, %s316
    %s331 = sphi 0, %s317
    %s335 = sphi 0, %s335
    %s337 = sphi 0, %s335
    %s338 = sphi 0, %s337
    %s352 = sphi 0, %s338
    %s356 = sphi 0, %s356
    %s358 = sphi 0, %s356
    %s359 = sphi 0, %s358
    %s373 = sphi 0, %s359
    %s377 = sphi 0, %s377
    %s379 = sphi 0, %s377
    %s380 = sphi 0, %s379
    %s394 = sphi 0, %s380
    %s398 = sphi 0, %s398
    %s400 = sphi 0, %s398
    %s401 = sphi 0, %s400
    %s415 = sphi 0, %s401
    %s419 = sphi 0, %s419
    %s421 = sphi 0, %s419
    %s422 = sphi 0, %s421
    %s436 = sphi 0, %s422
    %s440 = sphi 0, %s440
    %s442 = sphi 0, %s440
    %s443 = sphi 0, %s442
    %s457 = sphi 0, %s443
    %s461 = sphi 0, %s461
    %s463 = sphi 0, %s461
    %s464 = sphi 0, %s463
    %s478 = sphi 0, %s464
    %s482 = sphi 0, %s482
    %s484 = sphi 0, %s482
    %s485 = sphi 0, %s484
    %s499 = sphi 0, %s485
    %s505 = sphi 0, %s507
    %s508 = sphi 0, %s505
    %s509 = sphi 0, %s508
    %s525 = sphi 0, %s509
  $region4: #{deeplabv3_wrapper_forward.3} parent=0 // loop_header_branch
    %31 = sbr.rel (%p29) target = $region8
  $region5: #{deeplabv3_wrapper_forward.3} parent=0 // loop_body
    %s33 = ssub.s32 %s28, 1
    %s34 = ssub.s32 %s28, 2
    %s35 = sadd.s32 %s28, 1
    %s36 = ssub.s32 %s28, %s35
    %p37 = scmp.eq.s32.totalorder %s36, 0
    %s39 = sadd.s32 %s38, 1
    %s40 = scalar_select %p37, %s38, %s39
    %p43 = pneg %p37
    %p44 = scmp.eq.s32.totalorder %s28, 1
    %p45 = por %p43, %p44
    %p46 = scmp.ne.s32.totalorder %s38, %s41
    %p47 = scmp.eq.s32.totalorder %s28, 0
    %p48 = por %p46, %p47
    %p49 = scmp.ne.s32.totalorder %s38, %s41
    %p50 = scmp.eq.s32.totalorder %s33, 1
    %p51 = por %p49, %p50
    %p52 = scmp.ne.s32.totalorder %s41, %s42
    %p53 = scmp.eq.s32.totalorder %s33, 0
    %p54 = por %p52, %p53
    %p55 = scmp.ne.s32.totalorder %s41, %s42
    %p56 = scmp.eq.s32.totalorder %s34, 1
    %p57 = por %p55, %p56
    %p59 = scmp.ne.s32.totalorder %s42, %s58
    %p60 = scmp.eq.s32.totalorder %s34, 0
    %p61 = por %p59, %p60
    %s63 = sadd.s32 %s62, 1
    %p66 = scmp.eq.s32.totalorder %s28, 1
    %p67 = scmp.ne.s32.totalorder %s62, %s64
    %p68 = scmp.eq.s32.totalorder %s28, 0
    %p69 = por %p67, %p68
    %p70 = scmp.ne.s32.totalorder %s62, %s64
    %p71 = scmp.eq.s32.totalorder %s33, 1
    %p72 = por %p70, %p71
    %p73 = scmp.ne.s32.totalorder %s64, %s65
    %p74 = scmp.eq.s32.totalorder %s33, 0
    %p75 = por %p73, %p74
    %p76 = scmp.ne.s32.totalorder %s64, %s65
    %p77 = scmp.eq.s32.totalorder %s34, 1
    %p78 = por %p76, %p77
    %p80 = scmp.ne.s32.totalorder %s65, %s79
    %p81 = scmp.eq.s32.totalorder %s34, 0
    %p82 = por %p80, %p81
    %s84 = sadd.s32 %s83, 1
    %p87 = scmp.eq.s32.totalorder %s28, 1
    %p88 = scmp.ne.s32.totalorder %s83, %s85
    %p89 = scmp.eq.s32.totalorder %s28, 0
    %p90 = por %p88, %p89
    %p91 = scmp.ne.s32.totalorder %s83, %s85
    %p92 = scmp.eq.s32.totalorder %s33, 1
    %p93 = por %p91, %p92
    %p94 = scmp.ne.s32.totalorder %s85, %s86
    %p95 = scmp.eq.s32.totalorder %s33, 0
    %p96 = por %p94, %p95
    %p97 = scmp.ne.s32.totalorder %s85, %s86
    %p98 = scmp.eq.s32.totalorder %s34, 1
    %p99 = por %p97, %p98
    %p101 = scmp.ne.s32.totalorder %s86, %s100
    %p102 = scmp.eq.s32.totalorder %s34, 0
    %p103 = por %p101, %p102
    %s105 = sadd.s32 %s104, 1
    %p108 = scmp.eq.s32.totalorder %s28, 1
    %p109 = scmp.ne.s32.totalorder %s104, %s106
    %p110 = scmp.eq.s32.totalorder %s28, 0
    %p111 = por %p109, %p110
    %p112 = scmp.ne.s32.totalorder %s104, %s106
    %p113 = scmp.eq.s32.totalorder %s33, 1
    %p114 = por %p112, %p113
    %p115 = scmp.ne.s32.totalorder %s106, %s107
    %p116 = scmp.eq.s32.totalorder %s33, 0
    %p117 = por %p115, %p116
    %p118 = scmp.ne.s32.totalorder %s106, %s107
    %p119 = scmp.eq.s32.totalorder %s34, 1
    %p120 = por %p118, %p119
    %p122 = scmp.ne.s32.totalorder %s107, %s121
    %p123 = scmp.eq.s32.totalorder %s34, 0
    %p124 = por %p122, %p123
    %s126 = sadd.s32 %s125, 1
    %p129 = scmp.eq.s32.totalorder %s28, 1
    %p130 = scmp.ne.s32.totalorder %s125, %s127
    %p131 = scmp.eq.s32.totalorder %s28, 0
    %p132 = por %p130, %p131
    %p133 = scmp.ne.s32.totalorder %s125, %s127
    %p134 = scmp.eq.s32.totalorder %s33, 1
    %p135 = por %p133, %p134
    %p136 = scmp.ne.s32.totalorder %s127, %s128
    %p137 = scmp.eq.s32.totalorder %s33, 0
    %p138 = por %p136, %p137
    %p139 = scmp.ne.s32.totalorder %s127, %s128
    %p140 = scmp.eq.s32.totalorder %s34, 1
    %p141 = por %p139, %p140
    %p143 = scmp.ne.s32.totalorder %s128, %s142
    %p144 = scmp.eq.s32.totalorder %s34, 0
    %p145 = por %p143, %p144
    %s147 = sadd.s32 %s146, 1
    %p150 = scmp.eq.s32.totalorder %s28, 1
    %p151 = scmp.ne.s32.totalorder %s146, %s148
    %p152 = scmp.eq.s32.totalorder %s28, 0
    %p153 = por %p151, %p152
    %p154 = scmp.ne.s32.totalorder %s146, %s148
    %p155 = scmp.eq.s32.totalorder %s33, 1
    %p156 = por %p154, %p155
    %p157 = scmp.ne.s32.totalorder %s148, %s149
    %p158 = scmp.eq.s32.totalorder %s33, 0
    %p159 = por %p157, %p158
    %p160 = scmp.ne.s32.totalorder %s148, %s149
    %p161 = scmp.eq.s32.totalorder %s34, 1
    %p162 = por %p160, %p161
    %p164 = scmp.ne.s32.totalorder %s149, %s163
    %p165 = scmp.eq.s32.totalorder %s34, 0
    %p166 = por %p164, %p165
    %s168 = sadd.s32 %s167, 1
    %p171 = scmp.eq.s32.totalorder %s28, 1
    %p172 = scmp.ne.s32.totalorder %s167, %s169
    %p173 = scmp.eq.s32.totalorder %s28, 0
    %p174 = por %p172, %p173
    %p175 = scmp.ne.s32.totalorder %s167, %s169
    %p176 = scmp.eq.s32.totalorder %s33, 1
    %p177 = por %p175, %p176
    %p178 = scmp.ne.s32.totalorder %s169, %s170
    %p179 = scmp.eq.s32.totalorder %s33, 0
    %p180 = por %p178, %p179
    %p181 = scmp.ne.s32.totalorder %s169, %s170
    %p182 = scmp.eq.s32.totalorder %s34, 1
    %p183 = por %p181, %p182
    %p185 = scmp.ne.s32.totalorder %s170, %s184
    %p186 = scmp.eq.s32.totalorder %s34, 0
    %p187 = por %p185, %p186
    %s189 = sadd.s32 %s188, 1
    %p192 = scmp.eq.s32.totalorder %s28, 1
    %p193 = scmp.ne.s32.totalorder %s188, %s190
    %p194 = scmp.eq.s32.totalorder %s28, 0
    %p195 = por %p193, %p194
    %p196 = scmp.ne.s32.totalorder %s188, %s190
    %p197 = scmp.eq.s32.totalorder %s33, 1
    %p198 = por %p196, %p197
    %p199 = scmp.ne.s32.totalorder %s190, %s191
    %p200 = scmp.eq.s32.totalorder %s33, 0
    %p201 = por %p199, %p200
    %p202 = scmp.ne.s32.totalorder %s190, %s191
    %p203 = scmp.eq.s32.totalorder %s34, 1
    %p204 = por %p202, %p203
    %p206 = scmp.ne.s32.totalorder %s191, %s205
    %p207 = scmp.eq.s32.totalorder %s34, 0
    %p208 = por %p206, %p207
    %s210 = sadd.s32 %s209, 1
    %p213 = scmp.eq.s32.totalorder %s28, 1
    %p214 = scmp.ne.s32.totalorder %s209, %s211
    %p215 = scmp.eq.s32.totalorder %s28, 0
    %p216 = por %p214, %p215
    %p217 = scmp.ne.s32.totalorder %s209, %s211
    %p218 = scmp.eq.s32.totalorder %s33, 1
    %p219 = por %p217, %p218
    %p220 = scmp.ne.s32.totalorder %s211, %s212
    %p221 = scmp.eq.s32.totalorder %s33, 0
    %p222 = por %p220, %p221
    %p223 = scmp.ne.s32.totalorder %s211, %s212
    %p224 = scmp.eq.s32.totalorder %s34, 1
    %p225 = por %p223, %p224
    %p227 = scmp.ne.s32.totalorder %s212, %s226
    %p228 = scmp.eq.s32.totalorder %s34, 0
    %p229 = por %p227, %p228
    %s231 = sadd.s32 %s230, 1
    %p234 = scmp.eq.s32.totalorder %s28, 1
    %p235 = scmp.ne.s32.totalorder %s230, %s232
    %p236 = scmp.eq.s32.totalorder %s28, 0
    %p237 = por %p235, %p236
    %p238 = scmp.ne.s32.totalorder %s230, %s232
    %p239 = scmp.eq.s32.totalorder %s33, 1
    %p240 = por %p238, %p239
    %p241 = scmp.ne.s32.totalorder %s232, %s233
    %p242 = scmp.eq.s32.totalorder %s33, 0
    %p243 = por %p241, %p242
    %p244 = scmp.ne.s32.totalorder %s232, %s233
    %p245 = scmp.eq.s32.totalorder %s34, 1
    %p246 = por %p244, %p245
    %p248 = scmp.ne.s32.totalorder %s233, %s247
    %p249 = scmp.eq.s32.totalorder %s34, 0
    %p250 = por %p248, %p249
    %s252 = sadd.s32 %s251, 1
    %p255 = scmp.eq.s32.totalorder %s28, 1
    %p256 = scmp.ne.s32.totalorder %s251, %s253
    %p257 = scmp.eq.s32.totalorder %s28, 0
    %p258 = por %p256, %p257
    %p259 = scmp.ne.s32.totalorder %s251, %s253
    %p260 = scmp.eq.s32.totalorder %s33, 1
    %p261 = por %p259, %p260
    %p262 = scmp.ne.s32.totalorder %s253, %s254
    %p263 = scmp.eq.s32.totalorder %s33, 0
    %p264 = por %p262, %p263
    %p265 = scmp.ne.s32.totalorder %s253, %s254
    %p266 = scmp.eq.s32.totalorder %s34, 1
    %p267 = por %p265, %p266
    %p269 = scmp.ne.s32.totalorder %s254, %s268
    %p270 = scmp.eq.s32.totalorder %s34, 0
    %p271 = por %p269, %p270
    %s273 = sadd.s32 %s272, 1
    %p276 = scmp.eq.s32.totalorder %s28, 1
    %p277 = scmp.ne.s32.totalorder %s272, %s274
    %p278 = scmp.eq.s32.totalorder %s28, 0
    %p279 = por %p277, %p278
    %p280 = scmp.ne.s32.totalorder %s272, %s274
    %p281 = scmp.eq.s32.totalorder %s33, 1
    %p282 = por %p280, %p281
    %p283 = scmp.ne.s32.totalorder %s274, %s275
    %p284 = scmp.eq.s32.totalorder %s33, 0
    %p285 = por %p283, %p284
    %p286 = scmp.ne.s32.totalorder %s274, %s275
    %p287 = scmp.eq.s32.totalorder %s34, 1
    %p288 = por %p286, %p287
    %p290 = scmp.ne.s32.totalorder %s275, %s289
    %p291 = scmp.eq.s32.totalorder %s34, 0
    %p292 = por %p290, %p291
    %s294 = sadd.s32 %s293, 1
    %p297 = scmp.eq.s32.totalorder %s28, 1
    %p298 = scmp.ne.s32.totalorder %s293, %s295
    %p299 = scmp.eq.s32.totalorder %s28, 0
    %p300 = por %p298, %p299
    %p301 = scmp.ne.s32.totalorder %s293, %s295
    %p302 = scmp.eq.s32.totalorder %s33, 1
    %p303 = por %p301, %p302
    %p304 = scmp.ne.s32.totalorder %s295, %s296
    %p305 = scmp.eq.s32.totalorder %s33, 0
    %p306 = por %p304, %p305
    %p307 = scmp.ne.s32.totalorder %s295, %s296
    %p308 = scmp.eq.s32.totalorder %s34, 1
    %p309 = por %p307, %p308
    %p311 = scmp.ne.s32.totalorder %s296, %s310
    %p312 = scmp.eq.s32.totalorder %s34, 0
    %p313 = por %p311, %p312
    %s315 = sadd.s32 %s314, 1
    %p318 = scmp.eq.s32.totalorder %s28, 1
    %p319 = scmp.ne.s32.totalorder %s314, %s316
    %p320 = scmp.eq.s32.totalorder %s28, 0
    %p321 = por %p319, %p320
    %p322 = scmp.ne.s32.totalorder %s314, %s316
    %p323 = scmp.eq.s32.totalorder %s33, 1
    %p324 = por %p322, %p323
    %p325 = scmp.ne.s32.totalorder %s316, %s317
    %p326 = scmp.eq.s32.totalorder %s33, 0
    %p327 = por %p325, %p326
    %p328 = scmp.ne.s32.totalorder %s316, %s317
    %p329 = scmp.eq.s32.totalorder %s34, 1
    %p330 = por %p328, %p329
    %p332 = scmp.ne.s32.totalorder %s317, %s331
    %p333 = scmp.eq.s32.totalorder %s34, 0
    %p334 = por %p332, %p333
    %s336 = sadd.s32 %s335, 1
    %p339 = scmp.eq.s32.totalorder %s28, 1
    %p340 = scmp.ne.s32.totalorder %s335, %s337
    %p341 = scmp.eq.s32.totalorder %s28, 0
    %p342 = por %p340, %p341
    %p343 = scmp.ne.s32.totalorder %s335, %s337
    %p344 = scmp.eq.s32.totalorder %s33, 1
    %p345 = por %p343, %p344
    %p346 = scmp.ne.s32.totalorder %s337, %s338
    %p347 = scmp.eq.s32.totalorder %s33, 0
    %p348 = por %p346, %p347
    %p349 = scmp.ne.s32.totalorder %s337, %s338
    %p350 = scmp.eq.s32.totalorder %s34, 1
    %p351 = por %p349, %p350
    %p353 = scmp.ne.s32.totalorder %s338, %s352
    %p354 = scmp.eq.s32.totalorder %s34, 0
    %p355 = por %p353, %p354
    %s357 = sadd.s32 %s356, 1
    %p360 = scmp.eq.s32.totalorder %s28, 1
    %p361 = scmp.ne.s32.totalorder %s356, %s358
    %p362 = scmp.eq.s32.totalorder %s28, 0
    %p363 = por %p361, %p362
    %p364 = scmp.ne.s32.totalorder %s356, %s358
    %p365 = scmp.eq.s32.totalorder %s33, 1
    %p366 = por %p364, %p365
    %p367 = scmp.ne.s32.totalorder %s358, %s359
    %p368 = scmp.eq.s32.totalorder %s33, 0
    %p369 = por %p367, %p368
    %p370 = scmp.ne.s32.totalorder %s358, %s359
    %p371 = scmp.eq.s32.totalorder %s34, 1
    %p372 = por %p370, %p371
    %p374 = scmp.ne.s32.totalorder %s359, %s373
    %p375 = scmp.eq.s32.totalorder %s34, 0
    %p376 = por %p374, %p375
    %s378 = sadd.s32 %s377, 1
    %p381 = scmp.eq.s32.totalorder %s28, 1
    %p382 = scmp.ne.s32.totalorder %s377, %s379
    %p383 = scmp.eq.s32.totalorder %s28, 0
    %p384 = por %p382, %p383
    %p385 = scmp.ne.s32.totalorder %s377, %s379
    %p386 = scmp.eq.s32.totalorder %s33, 1
    %p387 = por %p385, %p386
    %p388 = scmp.ne.s32.totalorder %s379, %s380
    %p389 = scmp.eq.s32.totalorder %s33, 0
    %p390 = por %p388, %p389
    %p391 = scmp.ne.s32.totalorder %s379, %s380
    %p392 = scmp.eq.s32.totalorder %s34, 1
    %p393 = por %p391, %p392
    %p395 = scmp.ne.s32.totalorder %s380, %s394
    %p396 = scmp.eq.s32.totalorder %s34, 0
    %p397 = por %p395, %p396
    %s399 = sadd.s32 %s398, 1
    %p402 = scmp.eq.s32.totalorder %s28, 1
    %p403 = scmp.ne.s32.totalorder %s398, %s400
    %p404 = scmp.eq.s32.totalorder %s28, 0
    %p405 = por %p403, %p404
    %p406 = scmp.ne.s32.totalorder %s398, %s400
    %p407 = scmp.eq.s32.totalorder %s33, 1
    %p408 = por %p406, %p407
    %p409 = scmp.ne.s32.totalorder %s400, %s401
    %p410 = scmp.eq.s32.totalorder %s33, 0
    %p411 = por %p409, %p410
    %p412 = scmp.ne.s32.totalorder %s400, %s401
    %p413 = scmp.eq.s32.totalorder %s34, 1
    %p414 = por %p412, %p413
    %p416 = scmp.ne.s32.totalorder %s401, %s415
    %p417 = scmp.eq.s32.totalorder %s34, 0
    %p418 = por %p416, %p417
    %s420 = sadd.s32 %s419, 1
    %p423 = scmp.eq.s32.totalorder %s28, 1
    %p424 = scmp.ne.s32.totalorder %s419, %s421
    %p425 = scmp.eq.s32.totalorder %s28, 0
    %p426 = por %p424, %p425
    %p427 = scmp.ne.s32.totalorder %s419, %s421
    %p428 = scmp.eq.s32.totalorder %s33, 1
    %p429 = por %p427, %p428
    %p430 = scmp.ne.s32.totalorder %s421, %s422
    %p431 = scmp.eq.s32.totalorder %s33, 0
    %p432 = por %p430, %p431
    %p433 = scmp.ne.s32.totalorder %s421, %s422
    %p434 = scmp.eq.s32.totalorder %s34, 1
    %p435 = por %p433, %p434
    %p437 = scmp.ne.s32.totalorder %s422, %s436
    %p438 = scmp.eq.s32.totalorder %s34, 0
    %p439 = por %p437, %p438
    %s441 = sadd.s32 %s440, 1
    %p444 = scmp.eq.s32.totalorder %s28, 1
    %p445 = scmp.ne.s32.totalorder %s440, %s442
    %p446 = scmp.eq.s32.totalorder %s28, 0
    %p447 = por %p445, %p446
    %p448 = scmp.ne.s32.totalorder %s440, %s442
    %p449 = scmp.eq.s32.totalorder %s33, 1
    %p450 = por %p448, %p449
    %p451 = scmp.ne.s32.totalorder %s442, %s443
    %p452 = scmp.eq.s32.totalorder %s33, 0
    %p453 = por %p451, %p452
    %p454 = scmp.ne.s32.totalorder %s442, %s443
    %p455 = scmp.eq.s32.totalorder %s34, 1
    %p456 = por %p454, %p455
    %p458 = scmp.ne.s32.totalorder %s443, %s457
    %p459 = scmp.eq.s32.totalorder %s34, 0
    %p460 = por %p458, %p459
    %s462 = sadd.s32 %s461, 1
    %p465 = scmp.eq.s32.totalorder %s28, 1
    %p466 = scmp.ne.s32.totalorder %s461, %s463
    %p467 = scmp.eq.s32.totalorder %s28, 0
    %p468 = por %p466, %p467
    %p469 = scmp.ne.s32.totalorder %s461, %s463
    %p470 = scmp.eq.s32.totalorder %s33, 1
    %p471 = por %p469, %p470
    %p472 = scmp.ne.s32.totalorder %s463, %s464
    %p473 = scmp.eq.s32.totalorder %s33, 0
    %p474 = por %p472, %p473
    %p475 = scmp.ne.s32.totalorder %s463, %s464
    %p476 = scmp.eq.s32.totalorder %s34, 1
    %p477 = por %p475, %p476
    %p479 = scmp.ne.s32.totalorder %s464, %s478
    %p480 = scmp.eq.s32.totalorder %s34, 0
    %p481 = por %p479, %p480
    %s483 = sadd.s32 %s482, 1
    %p486 = scmp.eq.s32.totalorder %s28, 1
    %p487 = scmp.ne.s32.totalorder %s482, %s484
    %p488 = scmp.eq.s32.totalorder %s28, 0
    %p489 = por %p487, %p488
    %p490 = scmp.ne.s32.totalorder %s482, %s484
    %p491 = scmp.eq.s32.totalorder %s33, 1
    %p492 = por %p490, %p491
    %p493 = scmp.ne.s32.totalorder %s484, %s485
    %p494 = scmp.eq.s32.totalorder %s33, 0
    %p495 = por %p493, %p494
    %p496 = scmp.ne.s32.totalorder %s484, %s485
    %p497 = scmp.eq.s32.totalorder %s34, 1
    %p498 = por %p496, %p497
    %p500 = scmp.ne.s32.totalorder %s485, %s499
    %p501 = scmp.eq.s32.totalorder %s34, 0
    %p502 = por %p500, %p501
    %s503 = ssub.s32 %s28, %s35
    %p504 = scmp.eq.s32.totalorder %s503, 0
    %s506 = sadd.s32 %s505, 1
    %s507 = scalar_select %p504, %s505, %s506
    %p510 = pneg %p504
    %p511 = scmp.eq.s32.totalorder %s28, 1
    %p512 = por %p510, %p511
    %p513 = scmp.ne.s32.totalorder %s505, %s508
    %p514 = scmp.eq.s32.totalorder %s28, 0
    %p515 = por %p513, %p514
    %p516 = scmp.ne.s32.totalorder %s505, %s508
    %p517 = scmp.eq.s32.totalorder %s33, 1
    %p518 = por %p516, %p517
    %p519 = scmp.ne.s32.totalorder %s508, %s509
    %p520 = scmp.eq.s32.totalorder %s33, 0
    %p521 = por %p519, %p520
    %p522 = scmp.ne.s32.totalorder %s508, %s509
    %p523 = scmp.eq.s32.totalorder %s34, 1
    %p524 = por %p522, %p523
    %p526 = scmp.ne.s32.totalorder %s509, %s525
    %p527 = scmp.eq.s32.totalorder %s34, 0
    %p528 = por %p526, %p527
    %p529 = scmp.le.s32.totalorder 1, %s28
    %p530 = scmp.lt.s32.totalorder %s28, 3
    %p531 = pnand %p529, %p530
    %p532 = pneg %p531
    // Predicated region
    $region9: #{deeplabv3_wrapper_forward.3} parent=5 // pred_check
      _
    $region10: #{deeplabv3_wrapper_forward.3} parent=5 // pred_check_branch
      %534 = sbr.rel (%p531) target = $region12
    $region11: #{deeplabv3_wrapper_forward.3} parent=5 // pred_region
      %s535 = ssub.s32 %s28, 1
      // Predicated region
      $region13: #{deeplabv3_wrapper_forward.3} parent=11 // pred_check
        %p536 = pneg %p75
      $region14: #{deeplabv3_wrapper_forward.3} parent=11 // pred_check_branch
        %538 = sbr.rel (%p536) target = $region16
      $region15: #{deeplabv3_wrapper_forward.3} parent=11 // pred_region
        _
      $region16: #{deeplabv3_wrapper_forward.3} parent=11 // pred_fallthru
        _
      // Predicated region
      $region17: #{deeplabv3_wrapper_forward.3} parent=11 // pred_check
        %p539 = pneg %p96
      $region18: #{deeplabv3_wrapper_forward.3} parent=11 // pred_check_branch
        %541 = sbr.rel (%p539) target = $region20
      $region19: #{deeplabv3_wrapper_forward.3} parent=11 // pred_region
        _
      $region20: #{deeplabv3_wrapper_forward.3} parent=11 // pred_fallthru
        _
      // Predicated region
      $region21: #{deeplabv3_wrapper_forward.3} parent=11 // pred_check
        %p542 = pneg %p117
      $region22: #{deeplabv3_wrapper_forward.3} parent=11 // pred_check_branch
        %544 = sbr.rel (%p542) target = $region24
      $region23: #{deeplabv3_wrapper_forward.3} parent=11 // pred_region
        _
      $region24: #{deeplabv3_wrapper_forward.3} parent=11 // pred_fallthru
        _
      // Predicated region
      $region25: #{deeplabv3_wrapper_forward.3} parent=11 // pred_check
        %p545 = pneg %p138
      $region26: #{deeplabv3_wrapper_forward.3} parent=11 // pred_check_branch
        %547 = sbr.rel (%p545) target = $region28
      $region27: #{deeplabv3_wrapper_forward.3} parent=11 // pred_region
        _
      $region28: #{deeplabv3_wrapper_forward.3} parent=11 // pred_fallthru
        _
      // Predicated region
      $region29: #{deeplabv3_wrapper_forward.3} parent=11 // pred_check
        %p548 = pneg %p159
      $region30: #{deeplabv3_wrapper_forward.3} parent=11 // pred_check_branch
        %550 = sbr.rel (%p548) target = $region32
      $region31: #{deeplabv3_wrapper_forward.3} parent=11 // pred_region
        _
      $region32: #{deeplabv3_wrapper_forward.3} parent=11 // pred_fallthru
        _
      // Predicated region
      $region33: #{deeplabv3_wrapper_forward.3} parent=11 // pred_check
        %p551 = pneg %p180
      $region34: #{deeplabv3_wrapper_forward.3} parent=11 // pred_check_branch
        %553 = sbr.rel (%p551) target = $region36
      $region35: #{deeplabv3_wrapper_forward.3} parent=11 // pred_region
        _
      $region36: #{deeplabv3_wrapper_forward.3} parent=11 // pred_fallthru
        _
      // Predicated region
      $region37: #{deeplabv3_wrapper_forward.3} parent=11 // pred_check
        %p554 = pneg %p201
      $region38: #{deeplabv3_wrapper_forward.3} parent=11 // pred_check_branch
        %556 = sbr.rel (%p554) target = $region40
      $region39: #{deeplabv3_wrapper_forward.3} parent=11 // pred_region
        _
      $region40: #{deeplabv3_wrapper_forward.3} parent=11 // pred_fallthru
        _
      // Predicated region
      $region41: #{deeplabv3_wrapper_forward.3} parent=11 // pred_check
        %p557 = pneg %p222
      $region42: #{deeplabv3_wrapper_forward.3} parent=11 // pred_check_branch
        %559 = sbr.rel (%p557) target = $region44
      $region43: #{deeplabv3_wrapper_forward.3} parent=11 // pred_region
        _
      $region44: #{deeplabv3_wrapper_forward.3} parent=11 // pred_fallthru
        _
      // Predicated region
      $region45: #{deeplabv3_wrapper_forward.3} parent=11 // pred_check
        %p560 = pneg %p243
      $region46: #{deeplabv3_wrapper_forward.3} parent=11 // pred_check_branch
        %562 = sbr.rel (%p560) target = $region48
      $region47: #{deeplabv3_wrapper_forward.3} parent=11 // pred_region
        _
      $region48: #{deeplabv3_wrapper_forward.3} parent=11 // pred_fallthru
        _
      // Predicated region
      $region49: #{deeplabv3_wrapper_forward.3} parent=11 // pred_check
        %p563 = pneg %p264
      $region50: #{deeplabv3_wrapper_forward.3} parent=11 // pred_check_branch
        %565 = sbr.rel (%p563) target = $region52
      $region51: #{deeplabv3_wrapper_forward.3} parent=11 // pred_region
        _
      $region52: #{deeplabv3_wrapper_forward.3} parent=11 // pred_fallthru
        _
      // Predicated region
      $region53: #{deeplabv3_wrapper_forward.3} parent=11 // pred_check
        %p566 = pneg %p285
      $region54: #{deeplabv3_wrapper_forward.3} parent=11 // pred_check_branch
        %568 = sbr.rel (%p566) target = $region56
      $region55: #{deeplabv3_wrapper_forward.3} parent=11 // pred_region
        _
      $region56: #{deeplabv3_wrapper_forward.3} parent=11 // pred_fallthru
        _
      // Predicated region
      $region57: #{deeplabv3_wrapper_forward.3} parent=11 // pred_check
        %p569 = pneg %p306
      $region58: #{deeplabv3_wrapper_forward.3} parent=11 // pred_check_branch
        %571 = sbr.rel (%p569) target = $region60
      $region59: #{deeplabv3_wrapper_forward.3} parent=11 // pred_region
        _
      $region60: #{deeplabv3_wrapper_forward.3} parent=11 // pred_fallthru
        _
      // Predicated region
      $region61: #{deeplabv3_wrapper_forward.3} parent=11 // pred_check
        %p572 = pneg %p327
      $region62: #{deeplabv3_wrapper_forward.3} parent=11 // pred_check_branch
        %574 = sbr.rel (%p572) target = $region64
      $region63: #{deeplabv3_wrapper_forward.3} parent=11 // pred_region
        _
      $region64: #{deeplabv3_wrapper_forward.3} parent=11 // pred_fallthru
        _
      // Predicated region
      $region65: #{deeplabv3_wrapper_forward.3} parent=11 // pred_check
        %p575 = pneg %p348
      $region66: #{deeplabv3_wrapper_forward.3} parent=11 // pred_check_branch
        %577 = sbr.rel (%p575) target = $region68
      $region67: #{deeplabv3_wrapper_forward.3} parent=11 // pred_region
        _
      $region68: #{deeplabv3_wrapper_forward.3} parent=11 // pred_fallthru
        _
      // Predicated region
      $region69: #{deeplabv3_wrapper_forward.3} parent=11 // pred_check
        %p578 = pneg %p369
      $region70: #{deeplabv3_wrapper_forward.3} parent=11 // pred_check_branch
        %580 = sbr.rel (%p578) target = $region72
      $region71: #{deeplabv3_wrapper_forward.3} parent=11 // pred_region
        _
      $region72: #{deeplabv3_wrapper_forward.3} parent=11 // pred_fallthru
        _
      // Predicated region
      $region73: #{deeplabv3_wrapper_forward.3} parent=11 // pred_check
        %p581 = pneg %p390
      $region74: #{deeplabv3_wrapper_forward.3} parent=11 // pred_check_branch
        %583 = sbr.rel (%p581) target = $region76
      $region75: #{deeplabv3_wrapper_forward.3} parent=11 // pred_region
        _
      $region76: #{deeplabv3_wrapper_forward.3} parent=11 // pred_fallthru
        _
      // Predicated region
      $region77: #{deeplabv3_wrapper_forward.3} parent=11 // pred_check
        %p584 = pneg %p411
      $region78: #{deeplabv3_wrapper_forward.3} parent=11 // pred_check_branch
        %586 = sbr.rel (%p584) target = $region80
      $region79: #{deeplabv3_wrapper_forward.3} parent=11 // pred_region
        _
      $region80: #{deeplabv3_wrapper_forward.3} parent=11 // pred_fallthru
        _
      // Predicated region
      $region81: #{deeplabv3_wrapper_forward.3} parent=11 // pred_check
        %p587 = pneg %p432
      $region82: #{deeplabv3_wrapper_forward.3} parent=11 // pred_check_branch
        %589 = sbr.rel (%p587) target = $region84
      $region83: #{deeplabv3_wrapper_forward.3} parent=11 // pred_region
        _
      $region84: #{deeplabv3_wrapper_forward.3} parent=11 // pred_fallthru
        _
      // Predicated region
      $region85: #{deeplabv3_wrapper_forward.3} parent=11 // pred_check
        %p590 = pneg %p453
      $region86: #{deeplabv3_wrapper_forward.3} parent=11 // pred_check_branch
        %592 = sbr.rel (%p590) target = $region88
      $region87: #{deeplabv3_wrapper_forward.3} parent=11 // pred_region
        _
      $region88: #{deeplabv3_wrapper_forward.3} parent=11 // pred_fallthru
        _
      // Predicated region
      $region89: #{deeplabv3_wrapper_forward.3} parent=11 // pred_check
        %p593 = pneg %p474
      $region90: #{deeplabv3_wrapper_forward.3} parent=11 // pred_check_branch
        %595 = sbr.rel (%p593) target = $region92
      $region91: #{deeplabv3_wrapper_forward.3} parent=11 // pred_region
        _
      $region92: #{deeplabv3_wrapper_forward.3} parent=11 // pred_fallthru
        _
      // Predicated region
      $region93: #{deeplabv3_wrapper_forward.3} parent=11 // pred_check
        %p596 = pneg %p495
      $region94: #{deeplabv3_wrapper_forward.3} parent=11 // pred_check_branch
        %598 = sbr.rel (%p596) target = $region96
      $region95: #{deeplabv3_wrapper_forward.3} parent=11 // pred_region
        _
      $region96: #{deeplabv3_wrapper_forward.3} parent=11 // pred_fallthru
        _
    $region12: #{deeplabv3_wrapper_forward.3} parent=5 // pred_fallthru
      _
    %p599 = scmp.lt.s32.totalorder %s28, 2
    // Predicated region
    $region97: #{deeplabv3_wrapper_forward.3} parent=5 // pred_check
      %p600 = pneg %p599
    $region98: #{deeplabv3_wrapper_forward.3} parent=5 // pred_check_branch
      %602 = sbr.rel (%p600) target = $region100
    $region99: #{deeplabv3_wrapper_forward.3} parent=5 // pred_region
      // Predicated region
      $region101: #{deeplabv3_wrapper_forward.3} parent=99 // pred_check
        %p603 = pneg %p48
      $region102: #{deeplabv3_wrapper_forward.3} parent=99 // pred_check_branch
        %605 = sbr.rel (%p603) target = $region104
      $region103: #{deeplabv3_wrapper_forward.3} parent=99 // pred_region
        %p606 = scmp.lt.s32.totalorder %s28, 1
        %s607 = scalar_select %p606, %s28, 1
        %s608 = smul.addr %s607, 4
        %s609 = smul.addr %s608, 4
        %s610 = scalar_lea.vmem %s0, %s609
      $region104: #{deeplabv3_wrapper_forward.3} parent=99 // pred_fallthru
        _
    $region100: #{deeplabv3_wrapper_forward.3} parent=5 // pred_fallthru
      _
    %p611 = scmp.le.s32.totalorder 1, %s28
    %p612 = scmp.lt.s32.totalorder %s28, 3
    %p613 = pnand %p611, %p612
    %p614 = pneg %p613
    // Predicated region
    $region105: #{deeplabv3_wrapper_forward.3} parent=5 // pred_check
      _
    $region106: #{deeplabv3_wrapper_forward.3} parent=5 // pred_check_branch
      %616 = sbr.rel (%p613) target = $region108
    $region107: #{deeplabv3_wrapper_forward.3} parent=5 // pred_region
      %s617 = ssub.s32 %s28, 1
      %p618 = scmp.lt.s32.totalorder %s33, 1
      %s619 = scalar_select %p618, %s33, 1
      %s620 = smul.addr %s619, 4
      %s621 = smul.addr %s620, 4
      %s622 = scalar_lea.vmem %s0, %s621
      %p623 = pneg %p54
      %p624 = pneg %p51
      %p625 = pneg %p75
      %p626 = pneg %p72
      %p627 = pneg %p96
      %p628 = pneg %p93
      %p629 = pneg %p117
      %p630 = pneg %p114
      %p631 = pneg %p138
      %p632 = pneg %p135
      %p633 = pneg %p159
      %p634 = pneg %p156
      %p635 = pneg %p180
      %p636 = pneg %p177
      %p637 = pneg %p201
      %p638 = pneg %p198
      %p639 = pneg %p222
      %p640 = pneg %p219
      %p641 = pneg %p243
      %p642 = pneg %p240
      %p643 = pneg %p264
      %p644 = pneg %p261
      %p645 = pneg %p285
      %p646 = pneg %p282
      %p647 = pneg %p306
      %p648 = pneg %p303
      %p649 = pneg %p327
      %p650 = pneg %p324
      %p651 = pneg %p348
      %p652 = pneg %p345
      %p653 = pneg %p369
      %p654 = pneg %p366
      %p655 = pneg %p390
      %p656 = pneg %p387
      %p657 = pneg %p411
      %p658 = pneg %p408
      %p659 = pneg %p432
      %p660 = pneg %p429
      %p661 = pneg %p453
      %p662 = pneg %p450
      %p663 = pneg %p474
      %p664 = pneg %p471
      %p665 = pneg %p495
      %p666 = pneg %p492
      %p667 = pneg %p521
      %p668 = pneg %p518
      %p669 = scmp.lt.s32.totalorder %s33, 1
      %s670 = scalar_select %p669, %s33, 1
      %s671 = smul.addr %s670, 5
      %s672 = smul.addr %s671, 4
      %s673 = scalar_lea.vmem %s22, %s672
      %p674 = scmp.lt.s32.totalorder %s33, 1
      %s675 = scalar_select %p674, %s33, 1
      %s676 = smul.addr %s675, 4
      %s677 = smul.addr %s676, 4
      %s678 = scalar_lea.vmem %s0, %s677
      %p679 = scmp.lt.s32.totalorder %s33, 1
      %s680 = scalar_select %p679, %s33, 1
      %s681 = smul.addr %s680, 5
      %s682 = smul.addr %s681, 4
      %s683 = scalar_lea.vmem %s22, %s682
      %v685 = vld [vmem:[%s678] sm:$0xff]
      %v686 = vld [vmem:[%s678 + $0x8] sm:$0xff]
      %v687 = vld [vmem:[%s1] sm:$0xf]
      %v688 = vld [vmem:[%s1 + $0x4] sm:$0xf]
      %v689 = vld [vmem:[%s1 + $0x8] sm:$0xf]
      %v690 = vld [vmem:[%s1 + $0xc] sm:$0xf]
      %v691 = vld [vmem:[%s1 + $0x10] sm:$0xf]
      %v692 = vld [vmem:[%s1 + $0x14] sm:$0xf]
      %v693 = vld [vmem:[%s1 + $0x18] sm:$0xf]
      %v694 = vld [vmem:[%s1 + $0x1c] sm:$0xf]
      %v695 = vld [vmem:[%s1 + $0x20] sm:$0xf]
      %v696 = vld [vmem:[%s1 + $0x24] sm:$0xf]
      %v697 = vld [vmem:[%s1 + $0x28] sm:$0xf]
      %v698 = vld [vmem:[%s1 + $0x2c] sm:$0xf]
      %v699 = vld [vmem:[%s1 + $0x30] sm:$0xf]
      %v700 = vld [vmem:[%s1 + $0x34] sm:$0xf]
      %v701 = vld [vmem:[%s1 + $0x38] sm:$0xf]
      %v702 = vld [vmem:[%s1 + $0x3c] sm:$0xf]
      %v703 = vld [vmem:[%s1 + $0x40] sm:$0xf]
      %v704 = vld [vmem:[%s1 + $0x44] sm:$0xf]
      %v707 = vunpack.c.l.b16 %v685
      %v708 = vunpack.c.h.b16 %v685
      %v709 = vunpack.c.l.b16 %v686
      %v710 = vunpack.c.h.b16 %v686
      %v711 = vpack.c.b16 %v709, %v707
      %v712 = vpack.c.b16 %v710, %v708
      %v732 = vunpack.c.l.b16 %v687
      %v733 = vunpack.c.l.b16 %v688
      %v734 = vunpack.c.l.b16 %v689
      %v735 = vunpack.c.l.b16 %v690
      %v736 = vunpack.c.l.b16 %v691
      %v737 = vunpack.c.l.b16 %v692
      %v738 = vunpack.c.l.b16 %v693
      %v739 = vunpack.c.l.b16 %v694
      %v740 = vunpack.c.l.b16 %v695
      %v741 = vunpack.c.l.b16 %v696
      %v742 = vunpack.c.l.b16 %v697
      %v743 = vunpack.c.l.b16 %v698
      %v744 = vunpack.c.l.b16 %v699
      %v745 = vunpack.c.l.b16 %v700
      %v746 = vunpack.c.l.b16 %v701
      %v747 = vunpack.c.l.b16 %v702
      %v748 = vunpack.c.l.b16 %v703
      %v749 = vunpack.c.l.b16 %v704
      %v750 = vpack.c.b16 %v733, %v732
      %v751 = vpack.c.b16 %v735, %v734
      %v752 = vpack.c.b16 %v737, %v736
      %v753 = vpack.c.b16 %v739, %v738
      %v754 = vpack.c.b16 %v741, %v740
      %v755 = vpack.c.b16 %v743, %v742
      %v756 = vpack.c.b16 %v745, %v744
      %v757 = vpack.c.b16 %v747, %v746
      %v758 = vpack.c.b16 %v749, %v748
      %vm768 = vcmask 130048
      %v770 = vsel %vm768, %v712, 0
      %772 = vmatpush.bf16.msra.mxu0 %v757
      %773 = vmatpush.bf16.msra.mxu0 %v756
      %774 = vmatpush.bf16.msra.mxu0 %v755
      %775 = vmatpush.bf16.msra.mxu0 %v754
      %776 = vmatpush.bf16.msra.mxu0 %v753
      %777 = vmatpush.bf16.msra.mxu0 %v752
      %778 = vmatpush.bf16.msra.mxu0 %v751
      %779 = vmatpush.bf16.msra.mxu0 %v750
      %780 = vmatmul.bf16.gmra.mxu0 %v711
      %v781 = vpop.f32.mrf.mxu0
      %v782 = vadd.f32 0.0, %v781
      %v783 = vpop.f32.mrf.mxu0
      %v784 = vadd.f32 0.0, %v783
      %785 = vdwg.mxu0
      %786 = vmatpush.bf16.msra.mxu0 0
      %787 = vmatpush.bf16.msra.mxu0 0
      %788 = vmatpush.bf16.msra.mxu0 0
      %789 = vmatpush.bf16.msra.mxu0 0
      %790 = vmatpush.bf16.msra.mxu0 0
      %791 = vmatpush.bf16.msra.mxu0 0
      %792 = vmatpush.bf16.msra.mxu0 0
      %793 = vmatpush.bf16.msra.mxu0 %v758
      %794 = vmatmul.bf16.gmra.mxu0 %v770
      %v795 = vpop.f32.mrf.mxu0
      %v796 = vadd.f32 %v782, %v795
      %v797 = vpop.f32.mrf.mxu0
      %v798 = vadd.f32 %v784, %v797
      %799 = vdwg.mxu0
      %v800 = vld [vmem:[%s2] sm:$0x1]
      %v802 = vperm.slane %v800, 0
      %v804 = vmul.f32 %v796, %v802
      %v805 = vmul.f32 %v798, %v802
      %v806 = vld [vmem:[%s3] sm:$0x1]
      %v808 = vperm.slane %v806, 0
      %v810 = vadd.f32 %v804, %v808
      %v811 = vadd.f32 %v805, %v808
      %v812 = vmax.f32 %v810, 0.0
      %v813 = vmax.f32 %v811, 0.0
      %vm814 = vcmask 261120
      %815 = vst.msk [vmem:[#allocation2] sm:$0xff] %vm814, 0.0
      %816 = vst.msk [vmem:[#allocation2 + $0x8] sm:$0xff] %vm814, 0.0
      %817 = vst.msk [vmem:[#allocation2 + $0x10] sm:$0xff] %vm814, 0.0
      %818 = vst.msk [vmem:[#allocation2 + $0x18] sm:$0xff] %vm814, 0.0
      %819 = vst.msk [vmem:[#allocation2 + $0x20] sm:$0xff] %vm814, 0.0
      %820 = vst.msk [vmem:[#allocation2 + $0x28] sm:$0xff] %vm814, 0.0
      %821 = vst.msk [vmem:[#allocation2 + $0x30] sm:$0xff] %vm814, 0.0
      %822 = vst.msk [vmem:[#allocation2 + $0x38] sm:$0xff] %vm814, 0.0
      %823 = vst.msk [vmem:[#allocation2 + $0x40] sm:$0xff] %vm814, 0.0
      %824 = vst.msk [vmem:[#allocation2 + $0x48] sm:$0xff] %vm814, 0.0
      %825 = vst.msk [vmem:[#allocation2 + $0x50] sm:$0xff] %vm814, 0.0
      %826 = vst.msk [vmem:[#allocation2 + $0x58] sm:$0xff] %vm814, 0.0
      %vm827 = vcmask 257024
      %828 = vst.msk [vmem:[#allocation2 + $0x60] sm:$0xf] %vm827, 0.0
      %829 = vst.msk [vmem:[#allocation2 + $0x21] sm:$0xf] %vm827, %v812
      %vm830 = vcmask 261124
      %831 = vst.msk [vmem:[#allocation2 + $0x27] sm:$0xf0] %vm830, %v812
      %832 = vst.msk [vmem:[#allocation2 + $0x35] sm:$0xf] %vm827, %v813
      %833 = vst.msk [vmem:[#allocation2 + $0x3b] sm:$0xf0] %vm830, %v813
      %v834 = vld [vmem:[#allocation2] sm:$0xff]
      %v835 = vld [vmem:[#allocation2 + $0x8] sm:$0xff]
      %v836 = vld [vmem:[#allocation2 + $0x10] sm:$0xff]
      %v837 = vld [vmem:[#allocation2 + $0x18] sm:$0xff]
      %v838 = vld [vmem:[#allocation2 + $0x20] sm:$0xff]
      %v839 = vld [vmem:[#allocation2 + $0x28] sm:$0xff]
      %v840 = vld [vmem:[#allocation2 + $0x30] sm:$0xff]
      %v841 = vld [vmem:[#allocation2 + $0x38] sm:$0xff]
      %v842 = vld [vmem:[#allocation2 + $0x40] sm:$0xff]
      %v843 = vld [vmem:[#allocation2 + $0x48] sm:$0xff]
      %v844 = vld [vmem:[#allocation2 + $0x50] sm:$0xff]
      %v845 = vld [vmem:[#allocation2 + $0x58] sm:$0xff]
      %v846 = vld [vmem:[#allocation2 + $0x60] sm:$0xf]
      %v847 = vpack.c.bf16 %v839, %v838
      %v848 = vpack.c.bf16 %v841, %v840
      %v849 = vpack.c.bf16 %v842, %v842
      %v850 = vld [vmem:[%s4] sm:$0xf]
      %v851 = vld [vmem:[%s4 + $0x4] sm:$0xf]
      %v852 = vld [vmem:[%s4 + $0x8] sm:$0xf]
      %v853 = vld [vmem:[%s4 + $0xc] sm:$0xf]
      %vm854 = vsmask.f32 7424
      %v856 = vshrl.u32 %v847, 16
      %v858 = vshll.u32 %v847, 16
      %v860 = vrot.slane %v858, 1
      %v861 = vor.u32 %v856, %v860
      %v863 = vshll.u32 %v848, 16
      %v865 = vrot.slane %v863, 1
      %v866 = vsel %vm854, %v861, %v865
      %v867 = vshrl.u32 %v848, 16
      %v869 = vor.u32 %v867, %v865
      %v871 = vshll.u32 %v849, 16
      %v873 = vrot.slane %v871, 1
      %v874 = vsel %vm854, %v869, %v873
      %v875 = vshrl.u32 %v849, 16
      %v877 = vor.u32 %v875, %v873
      %v882 = vunpack.c.l.b16 %v850
      %v883 = vunpack.c.l.b16 %v851
      %v884 = vunpack.c.l.b16 %v852
      %v885 = vunpack.c.l.b16 %v853
      %v886 = vpack.c.b16 %v883, %v882
      %v887 = vpack.c.b16 %v885, %v884
      %v891 = vsel %vm814, %v866, 0
      %v894 = vsel %vm814, %v874, 0
      %v897 = vsel %vm814, %v877, 0
      %899 = vmatpush.bf16.msra.mxu0 0
      %900 = vmatpush.bf16.msra.mxu0 0
      %901 = vmatpush.bf16.msra.mxu0 0
      %902 = vmatpush.bf16.msra.mxu0 0
      %903 = vmatpush.bf16.msra.mxu0 0
      %904 = vmatpush.bf16.msra.mxu0 0
      %905 = vmatpush.bf16.msra.mxu0 %v887
      %906 = vmatpush.bf16.msra.mxu0 %v886
      %907 = vmatmul.bf16.gmra.mxu0 %v891
      %v908 = vpop.f32.mrf.mxu0
      %v909 = vadd.f32 0.0, %v908
      %v910 = vpop.f32.mrf.mxu0
      %v911 = vadd.f32 0.0, %v910
      %912 = vmatmul.bf16.gmra.mxu0 %v894
      %v913 = vpop.f32.mrf.mxu0
      %v914 = vadd.f32 0.0, %v913
      %v915 = vpop.f32.mrf.mxu0
      %v916 = vadd.f32 0.0, %v915
      %917 = vmatmul.bf16.gmra.mxu0 %v897
      %v918 = vpop.f32.mrf.mxu0
      %v919 = vadd.f32 0.0, %v918
      %v920 = vpop.f32.mrf.mxu0
      %921 = vdwg.mxu0
      %v922 = vld [vmem:[%s5] sm:$0x1]
      %v924 = vperm.slane %v922, 0
      %v926 = vmul.f32 %v909, %v924
      %v927 = vmul.f32 %v911, %v924
      %v928 = vmul.f32 %v914, %v924
      %v929 = vmul.f32 %v916, %v924
      %v930 = vmul.f32 %v919, %v924
      %v931 = vld [vmem:[%s6] sm:$0x1]
      %v933 = vperm.slane %v931, 0
      %v935 = vadd.f32 %v926, %v933
      %v936 = vadd.f32 %v927, %v933
      %v937 = vadd.f32 %v928, %v933
      %v938 = vadd.f32 %v929, %v933
      %v939 = vadd.f32 %v930, %v933
      %v940 = vmax.f32 %v935, 0.0
      %v941 = vmax.f32 %v936, 0.0
      %v942 = vmax.f32 %v937, 0.0
      %v943 = vmax.f32 %v938, 0.0
      %v944 = vmax.f32 %v939, 0.0
      %vm950 = vcmask 1045504
      %v951 = vrot.slane %v835, 2
      %v952 = vrot.slane %v836, 2
      %v953 = vsel %vm950, %v951, %v952
      %v954 = vrot.slane %v837, 2
      %v955 = vsel %vm950, %v952, %v954
      %v956 = vrot.slane %v838, 2
      %v957 = vsel %vm950, %v954, %v956
      %v958 = vrot.slane %v839, 2
      %v959 = vsel %vm950, %v956, %v958
      %960 = vrot.lane.b32.xlu0 %v953, 32
      %v961 = vpop.permute.xlu0 %960
      %962 = vrot.lane.b32.xlu0 %v955, 32
      %v963 = vpop.permute.xlu0 %962
      %964 = vrot.lane.b32.xlu0 %v957, 32
      %v965 = vpop.permute.xlu0 %964
      %966 = vrot.lane.b32.xlu0 %v959, 32
      %v967 = vpop.permute.xlu0 %966
      %968 = vrot.lane.b32.xlu0 %v958, 32
      %v969 = vpop.permute.xlu0 %968
      %vm976 = vcmask 1043456
      %v977 = vrot.slane %v835, 4
      %v978 = vrot.slane %v836, 4
      %v979 = vsel %vm976, %v977, %v978
      %v980 = vrot.slane %v837, 4
      %v981 = vsel %vm976, %v978, %v980
      %v982 = vrot.slane %v838, 4
      %v983 = vsel %vm976, %v980, %v982
      %v984 = vrot.slane %v839, 4
      %v985 = vsel %vm976, %v982, %v984
      %v986 = vrot.slane %v840, 4
      %v987 = vsel %vm976, %v984, %v986
      %988 = vrot.lane.b32.xlu0 %v979, 64
      %v989 = vpop.permute.xlu0 %988
      %990 = vrot.lane.b32.xlu0 %v981, 64
      %v991 = vpop.permute.xlu0 %990
      %992 = vrot.lane.b32.xlu0 %v983, 64
      %v993 = vpop.permute.xlu0 %992
      %994 = vrot.lane.b32.xlu0 %v985, 64
      %v995 = vpop.permute.xlu0 %994
      %996 = vrot.lane.b32.xlu0 %v987, 64
      %v997 = vpop.permute.xlu0 %996
      %v1005 = vrot.slane %v841, 4
      %v1006 = vsel %vm976, %v986, %v1005
      %v1007 = vrot.slane %v842, 4
      %v1008 = vsel %vm976, %v1005, %v1007
      %1009 = vrot.lane.b32.xlu0 %v983, 96
      %v1010 = vpop.permute.xlu0 %1009
      %1011 = vrot.lane.b32.xlu0 %v985, 96
      %v1012 = vpop.permute.xlu0 %1011
      %1013 = vrot.lane.b32.xlu0 %v987, 96
      %v1014 = vpop.permute.xlu0 %1013
      %1015 = vrot.lane.b32.xlu0 %v1006, 96
      %v1016 = vpop.permute.xlu0 %1015
      %1017 = vrot.lane.b32.xlu0 %v1008, 96
      %v1018 = vpop.permute.xlu0 %1017
      %vm1024 = vcmask 1041408
      %v1025 = vrot.slane %v838, 6
      %v1026 = vrot.slane %v839, 6
      %v1027 = vsel %vm1024, %v1025, %v1026
      %v1028 = vrot.slane %v840, 6
      %v1029 = vsel %vm1024, %v1026, %v1028
      %v1030 = vrot.slane %v841, 6
      %v1031 = vsel %vm1024, %v1028, %v1030
      %v1032 = vrot.slane %v842, 6
      %v1033 = vsel %vm1024, %v1030, %v1032
      %1039 = vrot.lane.b32.xlu0 %v838, 32
      %v1040 = vpop.permute.xlu0 %1039
      %1041 = vrot.lane.b32.xlu0 %v839, 32
      %v1042 = vpop.permute.xlu0 %1041
      %1043 = vrot.lane.b32.xlu0 %v840, 32
      %v1044 = vpop.permute.xlu0 %1043
      %1045 = vrot.lane.b32.xlu0 %v841, 32
      %v1046 = vpop.permute.xlu0 %1045
      %1047 = vrot.lane.b32.xlu0 %v842, 32
      %v1048 = vpop.permute.xlu0 %1047
      %1056 = vrot.lane.b32.xlu0 %v840, 64
      %v1057 = vpop.permute.xlu0 %1056
      %1058 = vrot.lane.b32.xlu0 %v841, 64
      %v1059 = vpop.permute.xlu0 %1058
      %1060 = vrot.lane.b32.xlu0 %v842, 64
      %v1061 = vpop.permute.xlu0 %1060
      %1062 = vrot.lane.b32.xlu0 %v843, 64
      %v1063 = vpop.permute.xlu0 %1062
      %1064 = vrot.lane.b32.xlu0 %v844, 64
      %v1065 = vpop.permute.xlu0 %1064
      %v1071 = vrot.slane %v840, 2
      %v1072 = vrot.slane %v841, 2
      %v1073 = vsel %vm950, %v1071, %v1072
      %v1074 = vrot.slane %v842, 2
      %v1075 = vsel %vm950, %v1072, %v1074
      %v1076 = vrot.slane %v843, 2
      %v1077 = vsel %vm950, %v1074, %v1076
      %v1078 = vrot.slane %v844, 2
      %v1079 = vsel %vm950, %v1076, %v1078
      %1080 = vrot.lane.b32.xlu0 %v1073, 96
      %v1081 = vpop.permute.xlu0 %1080
      %1082 = vrot.lane.b32.xlu0 %v1075, 96
      %v1083 = vpop.permute.xlu0 %1082
      %1084 = vrot.lane.b32.xlu0 %v1077, 96
      %v1085 = vpop.permute.xlu0 %1084
      %1086 = vrot.lane.b32.xlu0 %v1079, 96
      %v1087 = vpop.permute.xlu0 %1086
      %1088 = vrot.lane.b32.xlu0 %v1078, 96
      %v1089 = vpop.permute.xlu0 %1088
      %v1096 = vrot.slane %v843, 4
      %v1097 = vsel %vm976, %v1007, %v1096
      %v1098 = vrot.slane %v844, 4
      %v1099 = vsel %vm976, %v1096, %v1098
      %v1100 = vrot.slane %v845, 4
      %v1101 = vsel %vm976, %v1098, %v1100
      %v1107 = vsel %vm814, %v835, %v961
      %v1108 = vsel %vm814, %v836, %v963
      %v1109 = vsel %vm814, %v837, %v965
      %v1110 = vsel %vm814, %v838, %v967
      %v1111 = vsel %vm814, %v839, %v969
      %vm1112 = vcmask 523264
      %v1113 = vsel %vm1112, %v1107, %v989
      %v1114 = vsel %vm1112, %v1108, %v991
      %v1115 = vsel %vm1112, %v1109, %v993
      %v1116 = vsel %vm1112, %v1110, %v995
      %v1117 = vsel %vm1112, %v1111, %v997
      %vm1118 = vcmask 785408
      %v1119 = vsel %vm1118, %v1113, %v1010
      %v1120 = vsel %vm1118, %v1114, %v1012
      %v1121 = vsel %vm1118, %v1115, %v1014
      %v1122 = vsel %vm1118, %v1116, %v1016
      %v1123 = vsel %vm1118, %v1117, %v1018
      %v1124 = vsel %vm814, %v1025, %v1040
      %v1125 = vsel %vm814, %v1027, %v1042
      %v1126 = vsel %vm814, %v1029, %v1044
      %v1127 = vsel %vm814, %v1031, %v1046
      %v1128 = vsel %vm814, %v1033, %v1048
      %v1129 = vsel %vm1112, %v1124, %v1057
      %v1130 = vsel %vm1112, %v1125, %v1059
      %v1131 = vsel %vm1112, %v1126, %v1061
      %v1132 = vsel %vm1112, %v1127, %v1063
      %v1133 = vsel %vm1112, %v1128, %v1065
      %v1134 = vsel %vm1118, %v1129, %v1081
      %v1135 = vsel %vm1118, %v1130, %v1083
      %v1136 = vsel %vm1118, %v1131, %v1085
      %v1137 = vsel %vm1118, %v1132, %v1087
      %v1138 = vsel %vm1118, %v1133, %v1089
      %v1139 = vpack.c.bf16 %v1120, %v1119
      %v1140 = vpack.c.bf16 %v1135, %v1134
      %v1141 = vpack.c.bf16 %v1008, %v1006
      %v1142 = vpack.c.bf16 %v1122, %v1121
      %v1143 = vpack.c.bf16 %v1137, %v1136
      %v1144 = vpack.c.bf16 %v1099, %v1097
      %v1145 = vpack.c.bf16 %v1123, %v1123
      %v1146 = vpack.c.bf16 %v1138, %v1138
      %v1147 = vpack.c.bf16 %v1101, %v1101
      %v1148 = vld [vmem:[%s7] sm:$0xf]
      %v1149 = vld [vmem:[%s7 + $0x4] sm:$0xf]
      %v1150 = vld [vmem:[%s7 + $0x8] sm:$0xf]
      %v1151 = vld [vmem:[%s7 + $0xc] sm:$0xf]
      %v1152 = vld [vmem:[%s7 + $0x10] sm:$0xf]
      %v1153 = vld [vmem:[%s7 + $0x14] sm:$0xf]
      %v1154 = vld [vmem:[%s7 + $0x18] sm:$0xf]
      %v1155 = vld [vmem:[%s7 + $0x1c] sm:$0xf]
      %v1156 = vld [vmem:[%s7 + $0x20] sm:$0xf]
      %v1157 = vld [vmem:[%s7 + $0x24] sm:$0xf]
      %v1158 = vld [vmem:[%s7 + $0x28] sm:$0xf]
      %v1159 = vld [vmem:[%s7 + $0x2c] sm:$0xf]
      %v1160 = vld [vmem:[%s7 + $0x30] sm:$0xf]
      %v1161 = vld [vmem:[%s7 + $0x34] sm:$0xf]
      %v1162 = vld [vmem:[%s7 + $0x38] sm:$0xf]
      %v1163 = vld [vmem:[%s7 + $0x3c] sm:$0xf]
      %v1164 = vld [vmem:[%s7 + $0x40] sm:$0xf]
      %v1165 = vld [vmem:[%s7 + $0x44] sm:$0xf]
      %v1166 = vld [vmem:[%s7 + $0x48] sm:$0xf]
      %v1167 = vld [vmem:[%s7 + $0x4c] sm:$0xf]
      %v1168 = vld [vmem:[%s7 + $0x50] sm:$0xf]
      %v1169 = vld [vmem:[%s7 + $0x54] sm:$0xf]
      %v1170 = vld [vmem:[%s7 + $0x58] sm:$0xf]
      %v1171 = vld [vmem:[%s7 + $0x5c] sm:$0xf]
      %v1172 = vld [vmem:[%s7 + $0x60] sm:$0xf]
      %v1173 = vld [vmem:[%s7 + $0x64] sm:$0xf]
      %v1174 = vld [vmem:[%s7 + $0x68] sm:$0xf]
      %v1175 = vld [vmem:[%s7 + $0x6c] sm:$0xf]
      %v1176 = vld [vmem:[%s7 + $0x70] sm:$0xf]
      %v1177 = vld [vmem:[%s7 + $0x74] sm:$0xf]
      %v1178 = vld [vmem:[%s7 + $0x78] sm:$0xf]
      %v1179 = vld [vmem:[%s7 + $0x7c] sm:$0xf]
      %v1180 = vld [vmem:[%s7 + $0x80] sm:$0xf]
      %v1181 = vld [vmem:[%s7 + $0x84] sm:$0xf]
      %v1182 = vld [vmem:[%s7 + $0x88] sm:$0xf]
      %v1183 = vld [vmem:[%s7 + $0x8c] sm:$0xf]
      %vm1184 = vsmask.f32 6400
      %v1186 = vshrl.u32 %v1139, 16
      %v1188 = vrot.slane %v1186, 1
      %v1189 = vshll.u32 %v1139, 16
      %v1191 = vrot.slane %v1189, 2
      %v1192 = vor.u32 %v1188, %v1191
      %v1194 = vshrl.u32 %v1142, 16
      %v1196 = vrot.slane %v1194, 1
      %v1197 = vshll.u32 %v1142, 16
      %v1199 = vrot.slane %v1197, 2
      %v1200 = vor.u32 %v1196, %v1199
      %v1201 = vsel %vm1184, %v1192, %v1200
      %v1203 = vshrl.u32 %v1140, 16
      %v1205 = vrot.slane %v1203, 1
      %v1206 = vshll.u32 %v1140, 16
      %v1208 = vrot.slane %v1206, 2
      %v1209 = vor.u32 %v1205, %v1208
      %v1211 = vshrl.u32 %v1143, 16
      %v1213 = vrot.slane %v1211, 1
      %v1214 = vshll.u32 %v1143, 16
      %v1216 = vrot.slane %v1214, 2
      %v1217 = vor.u32 %v1213, %v1216
      %v1218 = vsel %vm1184, %v1209, %v1217
      %v1220 = vshrl.u32 %v1141, 16
      %v1222 = vrot.slane %v1220, 1
      %v1223 = vshll.u32 %v1141, 16
      %v1225 = vrot.slane %v1223, 2
      %v1226 = vor.u32 %v1222, %v1225
      %v1228 = vshrl.u32 %v1144, 16
      %v1230 = vrot.slane %v1228, 1
      %v1231 = vshll.u32 %v1144, 16
      %v1233 = vrot.slane %v1231, 2
      %v1234 = vor.u32 %v1230, %v1233
      %v1235 = vsel %vm1184, %v1226, %v1234
      %v1237 = vshrl.u32 %v1145, 16
      %v1239 = vrot.slane %v1237, 1
      %v1240 = vshll.u32 %v1145, 16
      %v1242 = vrot.slane %v1240, 2
      %v1243 = vor.u32 %v1239, %v1242
      %v1244 = vsel %vm1184, %v1200, %v1243
      %v1246 = vshrl.u32 %v1146, 16
      %v1248 = vrot.slane %v1246, 1
      %v1249 = vshll.u32 %v1146, 16
      %v1251 = vrot.slane %v1249, 2
      %v1252 = vor.u32 %v1248, %v1251
      %v1253 = vsel %vm1184, %v1217, %v1252
      %v1255 = vshrl.u32 %v1147, 16
      %v1257 = vrot.slane %v1255, 1
      %v1258 = vshll.u32 %v1147, 16
      %v1260 = vrot.slane %v1258, 2
      %v1261 = vor.u32 %v1257, %v1260
      %v1262 = vsel %vm1184, %v1234, %v1261
      %v1305 = vunpack.c.l.b16 %v1148
      %v1306 = vunpack.c.l.b16 %v1149
      %v1307 = vunpack.c.l.b16 %v1150
      %v1308 = vunpack.c.l.b16 %v1151
      %v1309 = vunpack.c.l.b16 %v1152
      %v1310 = vunpack.c.l.b16 %v1153
      %v1311 = vunpack.c.l.b16 %v1154
      %v1312 = vunpack.c.l.b16 %v1155
      %v1313 = vunpack.c.l.b16 %v1156
      %v1314 = vunpack.c.l.b16 %v1157
      %v1315 = vunpack.c.l.b16 %v1158
      %v1316 = vunpack.c.l.b16 %v1159
      %v1317 = vunpack.c.l.b16 %v1160
      %v1318 = vunpack.c.l.b16 %v1161
      %v1319 = vunpack.c.l.b16 %v1162
      %v1320 = vunpack.c.l.b16 %v1163
      %v1321 = vunpack.c.l.b16 %v1164
      %v1322 = vunpack.c.l.b16 %v1165
      %v1323 = vunpack.c.l.b16 %v1166
      %v1324 = vunpack.c.l.b16 %v1167
      %v1325 = vunpack.c.l.b16 %v1168
      %v1326 = vunpack.c.l.b16 %v1169
      %v1327 = vunpack.c.l.b16 %v1170
      %v1328 = vunpack.c.l.b16 %v1171
      %v1329 = vunpack.c.l.b16 %v1172
      %v1330 = vunpack.c.l.b16 %v1173
      %v1331 = vunpack.c.l.b16 %v1174
      %v1332 = vunpack.c.l.b16 %v1175
      %v1333 = vunpack.c.l.b16 %v1176
      %v1334 = vunpack.c.l.b16 %v1177
      %v1335 = vunpack.c.l.b16 %v1178
      %v1336 = vunpack.c.l.b16 %v1179
      %v1337 = vunpack.c.l.b16 %v1180
      %v1338 = vunpack.c.l.b16 %v1181
      %v1339 = vunpack.c.l.b16 %v1182
      %v1340 = vunpack.c.l.b16 %v1183
      %v1341 = vpack.c.b16 %v1306, %v1305
      %v1342 = vpack.c.b16 %v1308, %v1307
      %v1343 = vpack.c.b16 %v1310, %v1309
      %v1344 = vpack.c.b16 %v1312, %v1311
      %v1345 = vpack.c.b16 %v1314, %v1313
      %v1346 = vpack.c.b16 %v1316, %v1315
      %v1347 = vpack.c.b16 %v1318, %v1317
      %v1348 = vpack.c.b16 %v1320, %v1319
      %v1349 = vpack.c.b16 %v1322, %v1321
      %v1350 = vpack.c.b16 %v1324, %v1323
      %v1351 = vpack.c.b16 %v1326, %v1325
      %v1352 = vpack.c.b16 %v1328, %v1327
      %v1353 = vpack.c.b16 %v1330, %v1329
      %v1354 = vpack.c.b16 %v1332, %v1331
      %v1355 = vpack.c.b16 %v1334, %v1333
      %v1356 = vpack.c.b16 %v1336, %v1335
      %v1357 = vpack.c.b16 %v1338, %v1337
      %v1358 = vpack.c.b16 %v1340, %v1339
      %v1378 = vsel %vm814, %v1235, 0
      %v1381 = vsel %vm814, %v1262, 0
      %v1384 = vsel %vm814, %v1261, 0
      %1386 = vmatpush.bf16.msra.mxu0 %v1348
      %1387 = vmatpush.bf16.msra.mxu0 %v1347
      %1388 = vmatpush.bf16.msra.mxu0 %v1346
      %1389 = vmatpush.bf16.msra.mxu0 %v1345
      %1390 = vmatpush.bf16.msra.mxu0 %v1344
      %1391 = vmatpush.bf16.msra.mxu0 %v1343
      %1392 = vmatpush.bf16.msra.mxu0 %v1342
      %1393 = vmatpush.bf16.msra.mxu0 %v1341
      %1394 = vmatmul.bf16.gmra.mxu0 %v1201
      %v1395 = vpop.f32.mrf.mxu0
      %v1396 = vadd.f32 0.0, %v1395
      %v1397 = vpop.f32.mrf.mxu0
      %v1398 = vadd.f32 0.0, %v1397
      %1399 = vmatmul.bf16.gmra.mxu0 %v1244
      %v1400 = vpop.f32.mrf.mxu0
      %v1401 = vadd.f32 0.0, %v1400
      %v1402 = vpop.f32.mrf.mxu0
      %v1403 = vadd.f32 0.0, %v1402
      %1404 = vmatmul.bf16.gmra.mxu0 %v1243
      %v1405 = vpop.f32.mrf.mxu0
      %v1406 = vadd.f32 0.0, %v1405
      %v1407 = vpop.f32.mrf.mxu0
      %1408 = vdwg.mxu0
      %1409 = vmatpush.bf16.msra.mxu0 %v1356
      %1410 = vmatpush.bf16.msra.mxu0 %v1355
      %1411 = vmatpush.bf16.msra.mxu0 %v1354
      %1412 = vmatpush.bf16.msra.mxu0 %v1353
      %1413 = vmatpush.bf16.msra.mxu0 %v1352
      %1414 = vmatpush.bf16.msra.mxu0 %v1351
      %1415 = vmatpush.bf16.msra.mxu0 %v1350
      %1416 = vmatpush.bf16.msra.mxu0 %v1349
      %1417 = vmatmul.bf16.gmra.mxu0 %v1218
      %v1418 = vpop.f32.mrf.mxu0
      %v1419 = vadd.f32 %v1396, %v1418
      %v1420 = vpop.f32.mrf.mxu0
      %v1421 = vadd.f32 %v1398, %v1420
      %1422 = vmatmul.bf16.gmra.mxu0 %v1253
      %v1423 = vpop.f32.mrf.mxu0
      %v1424 = vadd.f32 %v1401, %v1423
      %v1425 = vpop.f32.mrf.mxu0
      %v1426 = vadd.f32 %v1403, %v1425
      %1427 = vmatmul.bf16.gmra.mxu0 %v1252
      %v1428 = vpop.f32.mrf.mxu0
      %v1429 = vadd.f32 %v1406, %v1428
      %v1430 = vpop.f32.mrf.mxu0
      %1431 = vdwg.mxu0
      %1432 = vmatpush.bf16.msra.mxu0 0
      %1433 = vmatpush.bf16.msra.mxu0 0
      %1434 = vmatpush.bf16.msra.mxu0 0
      %1435 = vmatpush.bf16.msra.mxu0 0
      %1436 = vmatpush.bf16.msra.mxu0 0
      %1437 = vmatpush.bf16.msra.mxu0 0
      %1438 = vmatpush.bf16.msra.mxu0 %v1358
      %1439 = vmatpush.bf16.msra.mxu0 %v1357
      %1440 = vmatmul.bf16.gmra.mxu0 %v1378
      %v1441 = vpop.f32.mrf.mxu0
      %v1442 = vadd.f32 %v1419, %v1441
      %v1443 = vpop.f32.mrf.mxu0
      %v1444 = vadd.f32 %v1421, %v1443
      %1445 = vmatmul.bf16.gmra.mxu0 %v1381
      %v1446 = vpop.f32.mrf.mxu0
      %v1447 = vadd.f32 %v1424, %v1446
      %v1448 = vpop.f32.mrf.mxu0
      %v1449 = vadd.f32 %v1426, %v1448
      %1450 = vmatmul.bf16.gmra.mxu0 %v1384
      %v1451 = vpop.f32.mrf.mxu0
      %v1452 = vadd.f32 %v1429, %v1451
      %v1453 = vpop.f32.mrf.mxu0
      %1454 = vdwg.mxu0
      %v1455 = vld [vmem:[%s8] sm:$0x1]
      %v1457 = vperm.slane %v1455, 0
      %v1459 = vmul.f32 %v1442, %v1457
      %v1460 = vmul.f32 %v1444, %v1457
      %v1461 = vmul.f32 %v1447, %v1457
      %v1462 = vmul.f32 %v1449, %v1457
      %v1463 = vmul.f32 %v1452, %v1457
      %v1464 = vld [vmem:[%s9] sm:$0x1]
      %v1466 = vperm.slane %v1464, 0
      %v1468 = vadd.f32 %v1459, %v1466
      %v1469 = vadd.f32 %v1460, %v1466
      %v1470 = vadd.f32 %v1461, %v1466
      %v1471 = vadd.f32 %v1462, %v1466
      %v1472 = vadd.f32 %v1463, %v1466
      %v1473 = vmax.f32 %v1468, 0.0
      %v1474 = vmax.f32 %v1469, 0.0
      %v1475 = vmax.f32 %v1470, 0.0
      %v1476 = vmax.f32 %v1471, 0.0
      %v1477 = vmax.f32 %v1472, 0.0
      %vm1479 = vcmask 1044480
      %v1480 = vrot.slane %v834, 3
      %v1481 = vrot.slane %v835, 3
      %v1482 = vsel %vm1479, %v1480, %v1481
      %v1483 = vrot.slane %v836, 3
      %v1484 = vsel %vm1479, %v1481, %v1483
      %v1485 = vrot.slane %v837, 3
      %v1486 = vsel %vm1479, %v1483, %v1485
      %v1487 = vrot.slane %v838, 3
      %v1488 = vsel %vm1479, %v1485, %v1487
      %1489 = vrot.lane.b32.xlu0 %v1482, 32
      %v1490 = vpop.permute.xlu0 %1489
      %1491 = vrot.lane.b32.xlu0 %v1484, 32
      %v1492 = vpop.permute.xlu0 %1491
      %1493 = vrot.lane.b32.xlu0 %v1486, 32
      %v1494 = vpop.permute.xlu0 %1493
      %1495 = vrot.lane.b32.xlu0 %v1488, 32
      %v1496 = vpop.permute.xlu0 %1495
      %1497 = vrot.lane.b32.xlu0 %v1487, 32
      %v1498 = vpop.permute.xlu0 %1497
      %v1504 = vrot.slane %v834, 6
      %v1505 = vrot.slane %v835, 6
      %v1506 = vsel %vm1024, %v1504, %v1505
      %v1507 = vrot.slane %v836, 6
      %v1508 = vsel %vm1024, %v1505, %v1507
      %v1509 = vrot.slane %v837, 6
      %v1510 = vsel %vm1024, %v1507, %v1509
      %v1511 = vsel %vm1024, %v1509, %v1025
      %1512 = vrot.lane.b32.xlu0 %v1506, 64
      %v1513 = vpop.permute.xlu0 %1512
      %1514 = vrot.lane.b32.xlu0 %v1508, 64
      %v1515 = vpop.permute.xlu0 %1514
      %1516 = vrot.lane.b32.xlu0 %v1510, 64
      %v1517 = vpop.permute.xlu0 %1516
      %1518 = vrot.lane.b32.xlu0 %v1511, 64
      %v1519 = vpop.permute.xlu0 %1518
      %1520 = vrot.lane.b32.xlu0 %v1025, 64
      %v1521 = vpop.permute.xlu0 %1520
      %1527 = vrot.lane.b32.xlu0 %v1511, 96
      %v1528 = vpop.permute.xlu0 %1527
      %1529 = vrot.lane.b32.xlu0 %v1027, 96
      %v1530 = vpop.permute.xlu0 %1529
      %1531 = vrot.lane.b32.xlu0 %v1029, 96
      %v1532 = vpop.permute.xlu0 %1531
      %1533 = vrot.lane.b32.xlu0 %v1031, 96
      %v1534 = vpop.permute.xlu0 %1533
      %1535 = vrot.lane.b32.xlu0 %v1030, 96
      %v1536 = vpop.permute.xlu0 %1535
      %vm1542 = vcmask 1046528
      %v1543 = vrot.slane %v838, 1
      %v1544 = vrot.slane %v839, 1
      %v1545 = vsel %vm1542, %v1543, %v1544
      %v1546 = vrot.slane %v840, 1
      %v1547 = vsel %vm1542, %v1544, %v1546
      %v1548 = vrot.slane %v841, 1
      %v1549 = vsel %vm1542, %v1546, %v1548
      %v1550 = vrot.slane %v842, 1
      %v1551 = vsel %vm1542, %v1548, %v1550
      %1557 = vrot.lane.b32.xlu0 %v985, 32
      %v1558 = vpop.permute.xlu0 %1557
      %1559 = vrot.lane.b32.xlu0 %v987, 32
      %v1560 = vpop.permute.xlu0 %1559
      %1561 = vrot.lane.b32.xlu0 %v1006, 32
      %v1562 = vpop.permute.xlu0 %1561
      %1563 = vrot.lane.b32.xlu0 %v1008, 32
      %v1564 = vpop.permute.xlu0 %1563
      %1565 = vrot.lane.b32.xlu0 %v1007, 32
      %v1566 = vpop.permute.xlu0 %1565
      %1572 = vrot.lane.b32.xlu0 %v1008, 64
      %v1573 = vpop.permute.xlu0 %1572
      %1574 = vrot.lane.b32.xlu0 %v1097, 64
      %v1575 = vpop.permute.xlu0 %1574
      %1576 = vrot.lane.b32.xlu0 %v1099, 64
      %v1577 = vpop.permute.xlu0 %1576
      %1578 = vrot.lane.b32.xlu0 %v1101, 64
      %v1579 = vpop.permute.xlu0 %1578
      %1580 = vrot.lane.b32.xlu0 %v1100, 64
      %v1581 = vpop.permute.xlu0 %1580
      %vm1588 = vcmask 1040384
      %v1589 = vrot.slane %v841, 7
      %v1590 = vrot.slane %v842, 7
      %v1591 = vsel %vm1588, %v1589, %v1590
      %v1592 = vrot.slane %v843, 7
      %v1593 = vsel %vm1588, %v1590, %v1592
      %v1594 = vrot.slane %v844, 7
      %v1595 = vsel %vm1588, %v1592, %v1594
      %v1596 = vrot.slane %v845, 7
      %v1597 = vsel %vm1588, %v1594, %v1596
      %v1598 = vrot.slane %v846, 7
      %v1599 = vsel %vm1588, %v1596, %v1598
      %1600 = vrot.lane.b32.xlu0 %v1591, 96
      %v1601 = vpop.permute.xlu0 %1600
      %1602 = vrot.lane.b32.xlu0 %v1593, 96
      %v1603 = vpop.permute.xlu0 %1602
      %1604 = vrot.lane.b32.xlu0 %v1595, 96
      %v1605 = vpop.permute.xlu0 %1604
      %1606 = vrot.lane.b32.xlu0 %v1597, 96
      %v1607 = vpop.permute.xlu0 %1606
      %1608 = vrot.lane.b32.xlu0 %v1599, 96
      %v1609 = vpop.permute.xlu0 %1608
      %v1615 = vrot.slane %v845, 2
      %v1616 = vsel %vm950, %v1078, %v1615
      %v1617 = vrot.slane %v846, 2
      %v1618 = vsel %vm950, %v1615, %v1617
      %v1624 = vsel %vm814, %v834, %v1490
      %v1625 = vsel %vm814, %v835, %v1492
      %v1626 = vsel %vm814, %v836, %v1494
      %v1627 = vsel %vm814, %v837, %v1496
      %v1628 = vsel %vm814, %v838, %v1498
      %v1629 = vsel %vm1112, %v1624, %v1513
      %v1630 = vsel %vm1112, %v1625, %v1515
      %v1631 = vsel %vm1112, %v1626, %v1517
      %v1632 = vsel %vm1112, %v1627, %v1519
      %v1633 = vsel %vm1112, %v1628, %v1521
      %v1634 = vsel %vm1118, %v1629, %v1528
      %v1635 = vsel %vm1118, %v1630, %v1530
      %v1636 = vsel %vm1118, %v1631, %v1532
      %v1637 = vsel %vm1118, %v1632, %v1534
      %v1638 = vsel %vm1118, %v1633, %v1536
      %v1639 = vsel %vm814, %v1545, %v1558
      %v1640 = vsel %vm814, %v1547, %v1560
      %v1641 = vsel %vm814, %v1549, %v1562
      %v1642 = vsel %vm814, %v1551, %v1564
      %v1643 = vsel %vm814, %v1550, %v1566
      %v1644 = vsel %vm1112, %v1639, %v1573
      %v1645 = vsel %vm1112, %v1640, %v1575
      %v1646 = vsel %vm1112, %v1641, %v1577
      %v1647 = vsel %vm1112, %v1642, %v1579
      %v1648 = vsel %vm1112, %v1643, %v1581
      %v1649 = vsel %vm1118, %v1644, %v1601
      %v1650 = vsel %vm1118, %v1645, %v1603
      %v1651 = vsel %vm1118, %v1646, %v1605
      %v1652 = vsel %vm1118, %v1647, %v1607
      %v1653 = vsel %vm1118, %v1648, %v1609
      %v1654 = vpack.c.bf16 %v1635, %v1634
      %v1655 = vpack.c.bf16 %v1650, %v1649
      %v1656 = vpack.c.bf16 %v1079, %v1077
      %v1657 = vpack.c.bf16 %v1637, %v1636
      %v1658 = vpack.c.bf16 %v1652, %v1651
      %v1659 = vpack.c.bf16 %v1618, %v1616
      %v1660 = vpack.c.bf16 %v1638, %v1638
      %v1661 = vpack.c.bf16 %v1653, %v1653
      %v1662 = vpack.c.bf16 %v1617, %v1617
      %v1663 = vld [vmem:[%s10] sm:$0xf]
      %v1664 = vld [vmem:[%s10 + $0x4] sm:$0xf]
      %v1665 = vld [vmem:[%s10 + $0x8] sm:$0xf]
      %v1666 = vld [vmem:[%s10 + $0xc] sm:$0xf]
      %v1667 = vld [vmem:[%s10 + $0x10] sm:$0xf]
      %v1668 = vld [vmem:[%s10 + $0x14] sm:$0xf]
      %v1669 = vld [vmem:[%s10 + $0x18] sm:$0xf]
      %v1670 = vld [vmem:[%s10 + $0x1c] sm:$0xf]
      %v1671 = vld [vmem:[%s10 + $0x20] sm:$0xf]
      %v1672 = vld [vmem:[%s10 + $0x24] sm:$0xf]
      %v1673 = vld [vmem:[%s10 + $0x28] sm:$0xf]
      %v1674 = vld [vmem:[%s10 + $0x2c] sm:$0xf]
      %v1675 = vld [vmem:[%s10 + $0x30] sm:$0xf]
      %v1676 = vld [vmem:[%s10 + $0x34] sm:$0xf]
      %v1677 = vld [vmem:[%s10 + $0x38] sm:$0xf]
      %v1678 = vld [vmem:[%s10 + $0x3c] sm:$0xf]
      %v1679 = vld [vmem:[%s10 + $0x40] sm:$0xf]
      %v1680 = vld [vmem:[%s10 + $0x44] sm:$0xf]
      %v1681 = vld [vmem:[%s10 + $0x48] sm:$0xf]
      %v1682 = vld [vmem:[%s10 + $0x4c] sm:$0xf]
      %v1683 = vld [vmem:[%s10 + $0x50] sm:$0xf]
      %v1684 = vld [vmem:[%s10 + $0x54] sm:$0xf]
      %v1685 = vld [vmem:[%s10 + $0x58] sm:$0xf]
      %v1686 = vld [vmem:[%s10 + $0x5c] sm:$0xf]
      %v1687 = vld [vmem:[%s10 + $0x60] sm:$0xf]
      %v1688 = vld [vmem:[%s10 + $0x64] sm:$0xf]
      %v1689 = vld [vmem:[%s10 + $0x68] sm:$0xf]
      %v1690 = vld [vmem:[%s10 + $0x6c] sm:$0xf]
      %v1691 = vld [vmem:[%s10 + $0x70] sm:$0xf]
      %v1692 = vld [vmem:[%s10 + $0x74] sm:$0xf]
      %v1693 = vld [vmem:[%s10 + $0x78] sm:$0xf]
      %v1694 = vld [vmem:[%s10 + $0x7c] sm:$0xf]
      %v1695 = vld [vmem:[%s10 + $0x80] sm:$0xf]
      %v1696 = vld [vmem:[%s10 + $0x84] sm:$0xf]
      %v1697 = vld [vmem:[%s10 + $0x88] sm:$0xf]
      %v1698 = vld [vmem:[%s10 + $0x8c] sm:$0xf]
      %v1735 = vunpack.c.l.b16 %v1663
      %v1736 = vunpack.c.l.b16 %v1664
      %v1737 = vunpack.c.l.b16 %v1665
      %v1738 = vunpack.c.l.b16 %v1666
      %v1739 = vunpack.c.l.b16 %v1667
      %v1740 = vunpack.c.l.b16 %v1668
      %v1741 = vunpack.c.l.b16 %v1669
      %v1742 = vunpack.c.l.b16 %v1670
      %v1743 = vunpack.c.l.b16 %v1671
      %v1744 = vunpack.c.l.b16 %v1672
      %v1745 = vunpack.c.l.b16 %v1673
      %v1746 = vunpack.c.l.b16 %v1674
      %v1747 = vunpack.c.l.b16 %v1675
      %v1748 = vunpack.c.l.b16 %v1676
      %v1749 = vunpack.c.l.b16 %v1677
      %v1750 = vunpack.c.l.b16 %v1678
      %v1751 = vunpack.c.l.b16 %v1679
      %v1752 = vunpack.c.l.b16 %v1680
      %v1753 = vunpack.c.l.b16 %v1681
      %v1754 = vunpack.c.l.b16 %v1682
      %v1755 = vunpack.c.l.b16 %v1683
      %v1756 = vunpack.c.l.b16 %v1684
      %v1757 = vunpack.c.l.b16 %v1685
      %v1758 = vunpack.c.l.b16 %v1686
      %v1759 = vunpack.c.l.b16 %v1687
      %v1760 = vunpack.c.l.b16 %v1688
      %v1761 = vunpack.c.l.b16 %v1689
      %v1762 = vunpack.c.l.b16 %v1690
      %v1763 = vunpack.c.l.b16 %v1691
      %v1764 = vunpack.c.l.b16 %v1692
      %v1765 = vunpack.c.l.b16 %v1693
      %v1766 = vunpack.c.l.b16 %v1694
      %v1767 = vunpack.c.l.b16 %v1695
      %v1768 = vunpack.c.l.b16 %v1696
      %v1769 = vunpack.c.l.b16 %v1697
      %v1770 = vunpack.c.l.b16 %v1698
      %v1771 = vpack.c.b16 %v1736, %v1735
      %v1772 = vpack.c.b16 %v1738, %v1737
      %v1773 = vpack.c.b16 %v1740, %v1739
      %v1774 = vpack.c.b16 %v1742, %v1741
      %v1775 = vpack.c.b16 %v1744, %v1743
      %v1776 = vpack.c.b16 %v1746, %v1745
      %v1777 = vpack.c.b16 %v1748, %v1747
      %v1778 = vpack.c.b16 %v1750, %v1749
      %v1779 = vpack.c.b16 %v1752, %v1751
      %v1780 = vpack.c.b16 %v1754, %v1753
      %v1781 = vpack.c.b16 %v1756, %v1755
      %v1782 = vpack.c.b16 %v1758, %v1757
      %v1783 = vpack.c.b16 %v1760, %v1759
      %v1784 = vpack.c.b16 %v1762, %v1761
      %v1785 = vpack.c.b16 %v1764, %v1763
      %v1786 = vpack.c.b16 %v1766, %v1765
      %v1787 = vpack.c.b16 %v1768, %v1767
      %v1788 = vpack.c.b16 %v1770, %v1769
      %v1808 = vsel %vm814, %v1656, 0
      %v1811 = vsel %vm814, %v1659, 0
      %v1814 = vsel %vm814, %v1662, 0
      %1816 = vmatpush.bf16.msra.mxu0 %v1778
      %1817 = vmatpush.bf16.msra.mxu0 %v1777
      %1818 = vmatpush.bf16.msra.mxu0 %v1776
      %1819 = vmatpush.bf16.msra.mxu0 %v1775
      %1820 = vmatpush.bf16.msra.mxu0 %v1774
      %1821 = vmatpush.bf16.msra.mxu0 %v1773
      %1822 = vmatpush.bf16.msra.mxu0 %v1772
      %1823 = vmatpush.bf16.msra.mxu0 %v1771
      %1824 = vmatmul.bf16.gmra.mxu0 %v1654
      %v1825 = vpop.f32.mrf.mxu0
      %v1826 = vadd.f32 0.0, %v1825
      %v1827 = vpop.f32.mrf.mxu0
      %v1828 = vadd.f32 0.0, %v1827
      %1829 = vmatmul.bf16.gmra.mxu0 %v1657
      %v1830 = vpop.f32.mrf.mxu0
      %v1831 = vadd.f32 0.0, %v1830
      %v1832 = vpop.f32.mrf.mxu0
      %v1833 = vadd.f32 0.0, %v1832
      %1834 = vmatmul.bf16.gmra.mxu0 %v1660
      %v1835 = vpop.f32.mrf.mxu0
      %v1836 = vadd.f32 0.0, %v1835
      %v1837 = vpop.f32.mrf.mxu0
      %1838 = vdwg.mxu0
      %1839 = vmatpush.bf16.msra.mxu0 %v1786
      %1840 = vmatpush.bf16.msra.mxu0 %v1785
      %1841 = vmatpush.bf16.msra.mxu0 %v1784
      %1842 = vmatpush.bf16.msra.mxu0 %v1783
      %1843 = vmatpush.bf16.msra.mxu0 %v1782
      %1844 = vmatpush.bf16.msra.mxu0 %v1781
      %1845 = vmatpush.bf16.msra.mxu0 %v1780
      %1846 = vmatpush.bf16.msra.mxu0 %v1779
      %1847 = vmatmul.bf16.gmra.mxu0 %v1655
      %v1848 = vpop.f32.mrf.mxu0
      %v1849 = vadd.f32 %v1826, %v1848
      %v1850 = vpop.f32.mrf.mxu0
      %v1851 = vadd.f32 %v1828, %v1850
      %1852 = vmatmul.bf16.gmra.mxu0 %v1658
      %v1853 = vpop.f32.mrf.mxu0
      %v1854 = vadd.f32 %v1831, %v1853
      %v1855 = vpop.f32.mrf.mxu0
      %v1856 = vadd.f32 %v1833, %v1855
      %1857 = vmatmul.bf16.gmra.mxu0 %v1661
      %v1858 = vpop.f32.mrf.mxu0
      %v1859 = vadd.f32 %v1836, %v1858
      %v1860 = vpop.f32.mrf.mxu0
      %1861 = vdwg.mxu0
      %1862 = vmatpush.bf16.msra.mxu0 0
      %1863 = vmatpush.bf16.msra.mxu0 0
      %1864 = vmatpush.bf16.msra.mxu0 0
      %1865 = vmatpush.bf16.msra.mxu0 0
      %1866 = vmatpush.bf16.msra.mxu0 0
      %1867 = vmatpush.bf16.msra.mxu0 0
      %1868 = vmatpush.bf16.msra.mxu0 %v1788
      %1869 = vmatpush.bf16.msra.mxu0 %v1787
      %1870 = vmatmul.bf16.gmra.mxu0 %v1808
      %v1871 = vpop.f32.mrf.mxu0
      %v1872 = vadd.f32 %v1849, %v1871
      %v1873 = vpop.f32.mrf.mxu0
      %v1874 = vadd.f32 %v1851, %v1873
      %1875 = vmatmul.bf16.gmra.mxu0 %v1811
      %v1876 = vpop.f32.mrf.mxu0
      %v1877 = vadd.f32 %v1854, %v1876
      %v1878 = vpop.f32.mrf.mxu0
      %v1879 = vadd.f32 %v1856, %v1878
      %1880 = vmatmul.bf16.gmra.mxu0 %v1814
      %v1881 = vpop.f32.mrf.mxu0
      %v1882 = vadd.f32 %v1859, %v1881
      %v1883 = vpop.f32.mrf.mxu0
      %1884 = vdwg.mxu0
      %v1885 = vld [vmem:[%s11] sm:$0x1]
      %v1887 = vperm.slane %v1885, 0
      %v1889 = vmul.f32 %v1872, %v1887
      %v1890 = vmul.f32 %v1874, %v1887
      %v1891 = vmul.f32 %v1877, %v1887
      %v1892 = vmul.f32 %v1879, %v1887
      %v1893 = vmul.f32 %v1882, %v1887
      %v1894 = vld [vmem:[%s12] sm:$0x1]
      %v1896 = vperm.slane %v1894, 0
      %v1898 = vadd.f32 %v1889, %v1896
      %v1899 = vadd.f32 %v1890, %v1896
      %v1900 = vadd.f32 %v1891, %v1896
      %v1901 = vadd.f32 %v1892, %v1896
      %v1902 = vadd.f32 %v1893, %v1896
      %v1903 = vmax.f32 %v1898, 0.0
      %v1904 = vmax.f32 %v1899, 0.0
      %v1905 = vmax.f32 %v1900, 0.0
      %v1906 = vmax.f32 %v1901, 0.0
      %v1907 = vmax.f32 %v1902, 0.0
      %v1908 = vsel %vm814, %v1545, 0.0
      %v1909 = vsel %vm814, %v1547, 0.0
      %v1910 = vadd.f32 %v1908, %v1909
      %v1911 = vsel %vm814, %v1549, 0.0
      %v1912 = vadd.f32 %v1910, %v1911
      %v1913 = vsel %vm814, %v1551, 0.0
      %v1914 = vadd.f32 %v1912, %v1913
      %vm1915 = vcmask 254976
      %v1916 = vsel %vm1915, %v1550, 0.0
      %v1917 = vadd.f32 %v1914, %v1916
      %v1918 = vrot.slane %v1917, 4
      %v1919 = vadd.f32 %v1917, %v1918
      %v1920 = vrot.slane %v1919, 2
      %v1921 = vadd.f32 %v1919, %v1920
      %v1922 = vrot.slane %v1921, 1
      %v1923 = vadd.f32 %v1921, %v1922
      %v1924 = vmul.f32 %v1923, 0.0625
      %v1925 = vpack.c.bf16 %v1924, %v1924
      %v1926 = vld [vmem:[%s13] sm:$0xf]
      %v1927 = vld [vmem:[%s13 + $0x4] sm:$0xf]
      %v1928 = vld [vmem:[%s13 + $0x8] sm:$0xf]
      %v1929 = vld [vmem:[%s13 + $0xc] sm:$0xf]
      %v1934 = vunpack.c.l.b16 %v1926
      %v1935 = vunpack.c.l.b16 %v1927
      %v1936 = vunpack.c.l.b16 %v1928
      %v1937 = vunpack.c.l.b16 %v1929
      %v1938 = vpack.c.b16 %v1935, %v1934
      %v1939 = vpack.c.b16 %v1937, %v1936
      %v1943 = vsel %vm814, %v1925, 0
      %1945 = vmatpush.bf16.msra.mxu0 0
      %1946 = vmatpush.bf16.msra.mxu0 0
      %1947 = vmatpush.bf16.msra.mxu0 0
      %1948 = vmatpush.bf16.msra.mxu0 0
      %1949 = vmatpush.bf16.msra.mxu0 0
      %1950 = vmatpush.bf16.msra.mxu0 0
      %1951 = vmatpush.bf16.msra.mxu0 %v1939
      %1952 = vmatpush.bf16.msra.mxu0 %v1938
      %1953 = vmatmul.bf16.gmra.mxu0 %v1943
      %v1954 = vpop.f32.mrf.mxu0
      %v1955 = vadd.f32 0.0, %v1954
      %v1956 = vpop.f32.mrf.mxu0
      %1957 = vdwg.mxu0
      %v1958 = vld [vmem:[%s14] sm:$0x1]
      %v1959 = vmul.f32 %v1955, %v1958
      %v1960 = vld [vmem:[%s15] sm:$0x1]
      %v1961 = vadd.f32 %v1959, %v1960
      %v1962 = vmax.f32 %v1961, 0.0
      %1968 = vrot.lane.b32.xlu0 %v1473, 16
      %v1969 = vpop.permute.xlu0 %1968
      %1970 = vrot.lane.b32.xlu0 %v1474, 16
      %v1971 = vpop.permute.xlu0 %1970
      %1972 = vrot.lane.b32.xlu0 %v1475, 16
      %v1973 = vpop.permute.xlu0 %1972
      %1974 = vrot.lane.b32.xlu0 %v1476, 16
      %v1975 = vpop.permute.xlu0 %1974
      %1976 = vrot.lane.b32.xlu0 %v1477, 16
      %v1977 = vpop.permute.xlu0 %1976
      %1988 = vrot.lane.b32.xlu0 %v1903, 32
      %v1989 = vpop.permute.xlu0 %1988
      %1990 = vrot.lane.b32.xlu0 %v1904, 32
      %v1991 = vpop.permute.xlu0 %1990
      %1992 = vrot.lane.b32.xlu0 %v1905, 32
      %v1993 = vpop.permute.xlu0 %1992
      %1994 = vrot.lane.b32.xlu0 %v1906, 32
      %v1995 = vpop.permute.xlu0 %1994
      %1996 = vrot.lane.b32.xlu0 %v1907, 32
      %v1997 = vpop.permute.xlu0 %1996
      %v2003 = vsel %vm768, %v940, %v1969
      %v2004 = vsel %vm768, %v941, %v1971
      %v2005 = vsel %vm768, %v942, %v1973
      %v2006 = vsel %vm768, %v943, %v1975
      %v2007 = vsel %vm768, %v944, %v1977
      %v2008 = vsel %vm814, %v2003, %v1989
      %v2009 = vsel %vm814, %v2004, %v1991
      %v2010 = vsel %vm814, %v2005, %v1993
      %v2011 = vsel %vm814, %v2006, %v1995
      %v2012 = vsel %vm814, %v2007, %v1997
      %v2013 = vpack.c.bf16 %v2009, %v2008
      %v2014 = vpack.c.bf16 %v2011, %v2010
      %v2015 = vpack.c.bf16 %v2012, %v2012
      %v2016 = vld [vmem:[%s16] sm:$0xf]
      %v2017 = vld [vmem:[%s16 + $0x4] sm:$0xf]
      %v2018 = vld [vmem:[%s16 + $0x8] sm:$0xf]
      %v2019 = vld [vmem:[%s16 + $0xc] sm:$0xf]
      %v2020 = vld [vmem:[%s16 + $0x10] sm:$0xf]
      %v2021 = vld [vmem:[%s16 + $0x14] sm:$0xf]
      %v2022 = vpack.c.bf16 %v1962, %v1962
      %v2023 = vld [vmem:[%s17] sm:$0xf]
      %v2024 = vld [vmem:[%s17 + $0x4] sm:$0xf]
      %v2027 = vunpack.c.l.b16 %v2023
      %v2028 = vunpack.c.l.b16 %v2024
      %v2029 = vpack.c.b16 %v2028, %v2027
      %v2032 = vsel %vm768, %v2022, 0
      %2034 = vmatpush.bf16.msra.mxu0 0
      %2035 = vmatpush.bf16.msra.mxu0 0
      %2036 = vmatpush.bf16.msra.mxu0 0
      %2037 = vmatpush.bf16.msra.mxu0 0
      %2038 = vmatpush.bf16.msra.mxu0 0
      %2039 = vmatpush.bf16.msra.mxu0 0
      %2040 = vmatpush.bf16.msra.mxu0 0
      %2041 = vmatpush.bf16.msra.mxu0 %v2029
      %2042 = vmatmul.bf16.gmra.mxu0 %v2032
      %v2043 = vpop.f32.mrf.mxu0
      %v2044 = vadd.f32 0.0, %v2043
      %v2045 = vpop.f32.mrf.mxu0
      %2046 = vdwg.mxu0
      %v2047 = vperm.slane %v2044, 0
      %v2054 = vunpack.c.l.b16 %v2016
      %v2055 = vunpack.c.l.b16 %v2017
      %v2056 = vunpack.c.l.b16 %v2018
      %v2057 = vunpack.c.l.b16 %v2019
      %v2058 = vunpack.c.l.b16 %v2020
      %v2059 = vunpack.c.l.b16 %v2021
      %v2060 = vpack.c.b16 %v2055, %v2054
      %v2061 = vpack.c.b16 %v2057, %v2056
      %v2062 = vpack.c.b16 %v2059, %v2058
      %vm2066 = vcmask 392192
      %v2068 = vsel %vm2066, %v2013, 0
      %v2071 = vsel %vm2066, %v2014, 0
      %v2074 = vsel %vm2066, %v2015, 0
      %2076 = vmatpush.bf16.msra.mxu0 0
      %2077 = vmatpush.bf16.msra.mxu0 0
      %2078 = vmatpush.bf16.msra.mxu0 0
      %2079 = vmatpush.bf16.msra.mxu0 0
      %2080 = vmatpush.bf16.msra.mxu0 0
      %2081 = vmatpush.bf16.msra.mxu0 %v2062
      %2082 = vmatpush.bf16.msra.mxu0 %v2061
      %2083 = vmatpush.bf16.msra.mxu0 %v2060
      %2084 = vmatmul.bf16.gmra.mxu0 %v2068
      %v2085 = vpop.f32.mrf.mxu0
      %v2086 = vadd.f32 %v2047, %v2085
      %v2087 = vpop.f32.mrf.mxu0
      %v2088 = vadd.f32 %v2047, %v2087
      %2089 = vmatmul.bf16.gmra.mxu0 %v2071
      %v2090 = vpop.f32.mrf.mxu0
      %v2091 = vadd.f32 %v2047, %v2090
      %v2092 = vpop.f32.mrf.mxu0
      %v2093 = vadd.f32 %v2047, %v2092
      %2094 = vmatmul.bf16.gmra.mxu0 %v2074
      %v2095 = vpop.f32.mrf.mxu0
      %v2096 = vadd.f32 %v2047, %v2095
      %v2097 = vpop.f32.mrf.mxu0
      %2098 = vdwg.mxu0
      %v2099 = vld [vmem:[%s18] sm:$0x1]
      %v2101 = vperm.slane %v2099, 0
      %v2103 = vmul.f32 %v2086, %v2101
      %v2104 = vmul.f32 %v2088, %v2101
      %v2105 = vmul.f32 %v2091, %v2101
      %v2106 = vmul.f32 %v2093, %v2101
      %v2107 = vmul.f32 %v2096, %v2101
      %v2108 = vld [vmem:[%s19] sm:$0x1]
      %v2110 = vperm.slane %v2108, 0
      %v2112 = vadd.f32 %v2103, %v2110
      %v2113 = vadd.f32 %v2104, %v2110
      %v2114 = vadd.f32 %v2105, %v2110
      %v2115 = vadd.f32 %v2106, %v2110
      %v2116 = vadd.f32 %v2107, %v2110
      %v2117 = vmax.f32 %v2112, 0.0
      %v2118 = vmax.f32 %v2113, 0.0
      %v2119 = vmax.f32 %v2114, 0.0
      %v2120 = vmax.f32 %v2115, 0.0
      %v2121 = vmax.f32 %v2116, 0.0
      %v2122 = vpack.c.bf16 %v2118, %v2117
      %v2123 = vpack.c.bf16 %v2120, %v2119
      %v2124 = vpack.c.bf16 %v2121, %v2121
      %v2125 = vld [vmem:[%s20] sm:$0xf]
      %v2126 = vld [vmem:[%s20 + $0x4] sm:$0xf]
      %v2127 = vld [vmem:[%s21] sm:$0x1]
      %v2129 = vperm.slane %v2127, 0
      %v2133 = vunpack.c.l.b16 %v2125
      %v2134 = vunpack.c.l.b16 %v2126
      %v2135 = vpack.c.b16 %v2134, %v2133
      %v2138 = vsel %vm768, %v2122, 0
      %v2141 = vsel %vm768, %v2123, 0
      %v2144 = vsel %vm768, %v2124, 0
      %2146 = vmatpush.bf16.msra.mxu0 0
      %2147 = vmatpush.bf16.msra.mxu0 0
      %2148 = vmatpush.bf16.msra.mxu0 0
      %2149 = vmatpush.bf16.msra.mxu0 0
      %2150 = vmatpush.bf16.msra.mxu0 0
      %2151 = vmatpush.bf16.msra.mxu0 0
      %2152 = vmatpush.bf16.msra.mxu0 0
      %2153 = vmatpush.bf16.msra.mxu0 %v2135
      %2154 = vmatmul.bf16.gmra.mxu0 %v2138
      %v2155 = vpop.f32.mrf.mxu0
      %v2156 = vadd.f32 %v2129, %v2155
      %v2157 = vpop.f32.mrf.mxu0
      %v2158 = vadd.f32 %v2129, %v2157
      %2159 = vmatmul.bf16.gmra.mxu0 %v2141
      %v2160 = vpop.f32.mrf.mxu0
      %v2161 = vadd.f32 %v2129, %v2160
      %v2162 = vpop.f32.mrf.mxu0
      %v2163 = vadd.f32 %v2129, %v2162
      %2164 = vmatmul.bf16.gmra.mxu0 %v2144
      %v2165 = vpop.f32.mrf.mxu0
      %v2166 = vadd.f32 %v2129, %v2165
      %v2167 = vpop.f32.mrf.mxu0
      %2168 = vdwg.mxu0
      %v2169 = vpack.c.bf16 %v2156, %v2156
      %v2170 = vpack.c.bf16 %v2158, %v2158
      %v2171 = vpack.c.bf16 %v2161, %v2161
      %v2172 = vpack.c.bf16 %v2163, %v2163
      %v2173 = vpack.c.bf16 %v2166, %v2166
      %vm2174 = vcmask 60416
      %2175 = vst.msk [vmem:[%s683] sm:$0xf] %vm2174, %v2169
      %2176 = vst.msk [vmem:[%s683 + $0x4] sm:$0xf] %vm2174, %v2170
      %2177 = vst.msk [vmem:[%s683 + $0x8] sm:$0xf] %vm2174, %v2171
      %2178 = vst.msk [vmem:[%s683 + $0xc] sm:$0xf] %vm2174, %v2172
      %vm2179 = vcmask 57344
      %2180 = vst.msk [vmem:[%s683 + $0x10] sm:$0x1] %vm2179, %v2173
      %p2181 = scmp.lt.s32.totalorder %s33, 1
      %s2182 = scalar_select %p2181, %s33, 1
      %s2183 = smul.addr %s2182, 5
      %s2184 = smul.addr %s2183, 4
      %s2185 = scalar_lea.vmem %s22, %s2184
      // Predicated region
      $region109: #{deeplabv3_wrapper_forward.3} parent=107 // pred_check
        %p2186 = pneg %p518
      $region110: #{deeplabv3_wrapper_forward.3} parent=107 // pred_check_branch
        %2188 = sbr.rel (%p2186) target = $region112
      $region111: #{deeplabv3_wrapper_forward.3} parent=107 // pred_region
        _
      $region112: #{deeplabv3_wrapper_forward.3} parent=107 // pred_fallthru
        _
    $region108: #{deeplabv3_wrapper_forward.3} parent=5 // pred_fallthru
      _
    %p2189 = scmp.le.s32.totalorder 2, %s28
    // Predicated region
    $region113: #{deeplabv3_wrapper_forward.3} parent=5 // pred_check
      %p2190 = pneg %p2189
    $region114: #{deeplabv3_wrapper_forward.3} parent=5 // pred_check_branch
      %2192 = sbr.rel (%p2190) target = $region116
    $region115: #{deeplabv3_wrapper_forward.3} parent=5 // pred_region
      %s2193 = ssub.s32 %s28, 2
      // Predicated region
      $region117: #{deeplabv3_wrapper_forward.3} parent=115 // pred_check
        %p2194 = pneg %p524
      $region118: #{deeplabv3_wrapper_forward.3} parent=115 // pred_check_branch
        %2196 = sbr.rel (%p2194) target = $region120
      $region119: #{deeplabv3_wrapper_forward.3} parent=115 // pred_region
        %p2197 = scmp.lt.s32.totalorder %s34, 1
        %s2198 = scalar_select %p2197, %s34, 1
        %s2199 = smul.addr %s2198, 5
        %s2200 = smul.addr %s2199, 4
        %s2201 = scalar_lea.vmem %s22, %s2200
      $region120: #{deeplabv3_wrapper_forward.3} parent=115 // pred_fallthru
        _
    $region116: #{deeplabv3_wrapper_forward.3} parent=5 // pred_fallthru
      _
  $region6: #{deeplabv3_wrapper_forward.3} parent=0 // loop_footer
    %s32 = sadd.s32 1, %s28
  $region7: #{deeplabv3_wrapper_forward.3} parent=0 // loop_footer_branch
    %27 = sbr.rel target = $region3
  $region8: #{deeplabv3_wrapper_forward.3} parent=0 // loop_exit
    _

</llo_original>
